<compile_context>
chip_gen: v5e
topology: v5e:2x2
jax: 0.10.0
libtpu: 0.0.40
codegen_flags: <defaults>
</compile_context>

<pallas_src>
import functools
import math

import jax
import jax.numpy as jnp
from jax.experimental import pallas as pl
from jax.experimental.pallas import tpu as pltpu

BN_EPS = 1e-5
CDTYPE = jnp.bfloat16          # storage / MXU-input dtype (f32 accumulation)

_CPARAMS = pltpu.CompilerParams(
    dimension_semantics=("parallel",),
    vmem_limit_bytes=48 * 1024 * 1024,   # headroom for v7x's 64 MiB/TC VMEM
)


# ------------------------------ small helpers -------------------------------

def _pick_div(total, want):
    """Smallest divisor of `total` that is >= want (falls back to total)."""
    want = max(1, min(want, total))
    for d in range(want, total):
        if total % d == 0:
            return d
    return total


def _pick_rows(m, want=512):
    """Row-block size for 2-D matmul tiles (multiple of 8 unless full)."""
    d = _pick_div(m, want)
    if d != m and d % 8 != 0:
        return m
    return d


# ----------------------------- Pallas kernels ------------------------------

def _conv3x3_tap_kernel(*refs, H, W, relu, residual):
    # Fused 3x3 conv: the padded NHWC tile is DMA'd once and the 9 taps are
    # built in VMEM as shifted slices; 9 accumulating MXU dots into f32.
    if residual:
        x_ref, w_ref, b_ref, r_ref, o_ref = refs
    else:
        x_ref, w_ref, b_ref, o_ref = refs
        r_ref = None
    nb = x_ref.shape[0]
    cin = x_ref.shape[3]
    cout = w_ref.shape[2]
    m = nb * H * W
    acc = jnp.zeros((m, cout), jnp.float32)
    for kh in range(3):
        for kw in range(3):
            tap = x_ref[:, kh:kh + H, kw:kw + W, :]
            # Go through f32 so the (nb,H,W,Cin)->(m,Cin) collapse is an
            # (8,128)-tile-aligned (metadata-only) reshape (W % 8 == 0 on this
            # path), then back to bf16 for the MXU.
            tap = tap.astype(jnp.float32).reshape(m, cin).astype(CDTYPE)
            acc = acc + jnp.dot(tap, w_ref[kh * 3 + kw],
                                preferred_element_type=jnp.float32)
    acc = acc + b_ref[...]
    if r_ref is not None:
        acc = acc + r_ref[...].astype(jnp.float32)
    if relu:
        acc = jnp.maximum(acc, 0.0)
    o_ref[...] = acc.astype(o_ref.dtype)


def _matmul_kernel(*refs, relu, residual):
    # Generic fused (matmul + BN bias [+ residual] [+ ReLU]) kernel.
    if residual:
        x_ref, w_ref, b_ref, r_ref, o_ref = refs
    else:
        x_ref, w_ref, b_ref, o_ref = refs
        r_ref = None
    acc = jnp.dot(x_ref[...], w_ref[...], preferred_element_type=jnp.float32)
    acc = acc + b_ref[...]
    if r_ref is not None:
        acc = acc + r_ref[...].astype(jnp.float32)
    if relu:
        acc = jnp.maximum(acc, 0.0)
    o_ref[...] = acc.astype(o_ref.dtype)


def _maxpool_kernel(x_ref, o_ref):
    # x_ref: (d, p, Wo, p, C) -> max over the two window axes.
    x = x_ref[...]
    y = jnp.max(x, axis=3)               # column window (second-minor dim)
    o_ref[...] = jnp.max(y, axis=1)      # row window (leading dim)


def _head_kernel(x_ref, w_ref, b_ref, o_ref):
    # Batched head: global spatial amax + Linear classifier in one call.
    pooled = jnp.max(x_ref[...], axis=1)                         # (N, C)
    y = jnp.dot(pooled, w_ref[...], preferred_element_type=jnp.float32)
    o_ref[...] = (y + b_ref[...]).astype(o_ref.dtype)


# ------------------------------ kernel wrappers -----------------------------

def fused_matmul(x2d, w, b2, *, residual=None, relu=True):
    """x2d: (M, K) bf16, w: (K, Cout) bf16 (BN scale folded), b2: (1, Cout)."""
    M, K = x2d.shape
    Cout = w.shape[1]
    mb = _pick_rows(M)
    in_specs = [
        pl.BlockSpec((mb, K), lambda i: (i, 0)),
        pl.BlockSpec((K, Cout), lambda i: (0, 0)),      # weight stays resident
        pl.BlockSpec((1, Cout), lambda i: (0, 0)),
    ]
    args = [x2d, w, b2]
    if residual is not None:
        in_specs.append(pl.BlockSpec((mb, Cout), lambda i: (i, 0)))
        args.append(residual)
    kernel = functools.partial(_matmul_kernel, relu=relu,
                               residual=residual is not None)
    return pl.pallas_call(
        kernel,
        grid=(M // mb,),
        in_specs=in_specs,
        out_specs=pl.BlockSpec((mb, Cout), lambda i: (i, 0)),
        out_shape=jax.ShapeDtypeStruct((M, Cout), CDTYPE),
        compiler_params=_CPARAMS,
    )(*args)


def _im2col3x3(x4):
    # XLA-side im2col, only used for the tiny late-stage feature maps.
    N, H, W, C = x4.shape
    xp = jnp.pad(x4, ((0, 0), (1, 1), (1, 1), (0, 0)))
    cols = [xp[:, kh:kh + H, kw:kw + W, :] for kh in range(3) for kw in range(3)]
    col = jnp.stack(cols, axis=3)                                # (N,H,W,9,C)
    return col.reshape(N * H * W, 9 * C)


def conv3x3(x2d, N, H, W, w_oihw, bn_scale, bn_bias, *, relu=True,
            residual=None, in_scale=None):
    """3x3 conv (padding=1, bias=False) + BN affine (+residual +ReLU).

    x2d: flat (N*H*W, Cin) bf16 activation; w_oihw: PyTorch OIHW f32 weight.
    in_scale: optional per-input-channel scale (bn0) folded into the weight.
    Returns flat (N*H*W, Cout) bf16.
    """
    Cout, Cin = w_oihw.shape[0], w_oihw.shape[1]
    w = w_oihw
    if in_scale is not None:
        w = w * in_scale.reshape(1, Cin, 1, 1)
    w = w * bn_scale.reshape(Cout, 1, 1, 1)                      # fold BN scale
    wk = jnp.transpose(w, (2, 3, 1, 0))                          # (3,3,Cin,Cout)
    b2 = bn_bias.reshape(1, Cout).astype(jnp.float32)
    x4 = x2d.reshape(N, H, W, Cin)

    if W % 8 == 0:
        # Fused path: no HBM im2col -- build the taps in VMEM.
        xp = jnp.pad(x4, ((0, 0), (1, 1), (1, 1), (0, 0)))
        wt = wk.reshape(9, Cin, Cout).astype(CDTYPE)
        nb = _pick_div(N, max(1, 256 // (H * W)))
        mb = nb * H * W
        in_specs = [
            pl.BlockSpec((nb, H + 2, W + 2, Cin), lambda i: (i, 0, 0, 0)),
            pl.BlockSpec((9, Cin, Cout), lambda i: (0, 0, 0)),
            pl.BlockSpec((1, Cout), lambda i: (0, 0)),
        ]
        args = [xp, wt, b2]
        if residual is not None:
            in_specs.append(pl.BlockSpec((mb, Cout), lambda i: (i, 0)))
            args.append(residual)
        kernel = functools.partial(_conv3x3_tap_kernel, H=H, W=W, relu=relu,
                                   residual=residual is not None)
        return pl.pallas_call(
            kernel,
            grid=(N // nb,),
            in_specs=in_specs,
            out_specs=pl.BlockSpec((mb, Cout), lambda i: (i, 0)),
            out_shape=jax.ShapeDtypeStruct((N * H * W, Cout), CDTYPE),
            compiler_params=_CPARAMS,
        )(*args)

    # Small-spatial fallback (W < 8): XLA im2col + the same fused matmul kernel.
    col = _im2col3x3(x4).astype(CDTYPE)                          # (N*H*W, 9Cin)
    wm = wk.reshape(9 * Cin, Cout).astype(CDTYPE)
    return fused_matmul(col, wm, b2, residual=residual, relu=relu)


def conv1x1_bn(x2d, w_oihw, bn_scale, bn_bias):
    """1x1 conv + BN affine (scale folded into the weight), no ReLU."""
    Cout, Cin = w_oihw.shape[0], w_oihw.shape[1]
    wm = (w_oihw.reshape(Cout, Cin) * bn_scale.reshape(Cout, 1)).T.astype(CDTYPE)
    b2 = bn_bias.reshape(1, Cout).astype(jnp.float32)
    return fused_matmul(x2d, wm, b2, relu=False)


def max_pool2d(x2d, N, H, W, C, pool):
    """nn.MaxPool2d(pool) on a flat (N*H*W, C) activation (stride == pool)."""
    if pool == 1:
        return x2d, H, W
    Ho, Wo = H // pool, W // pool
    # Free row-major reshape (no XLA transpose pass): windows become axes.
    xv = x2d.reshape(N * Ho, pool, Wo, pool, C)
    d = _pick_div(N * Ho, max(1, 2048 // max(pool * Wo * pool, 1)))
    out = pl.pallas_call(
        _maxpool_kernel,
        grid=(N * Ho // d,),
        in_specs=[pl.BlockSpec((d, pool, Wo, pool, C),
                               lambda i: (i, 0, 0, 0, 0))],
        out_specs=pl.BlockSpec((d, Wo, C), lambda i: (i, 0, 0)),
        out_shape=jax.ShapeDtypeStruct((N * Ho, Wo, C), x2d.dtype),
        compiler_params=_CPARAMS,
    )(xv)
    return out.reshape(N * Ho * Wo, C), Ho, Wo


def head(x2d, N, HW, fc_w, fc_b):
    """x.amax over spatial followed by Linear(512, n_classes), one batched call."""
    ncls, C = fc_w.shape
    x3 = x2d.reshape(N, HW, C)
    wm = fc_w.T.astype(CDTYPE)                                   # (512, ncls)
    b2 = fc_b.reshape(1, ncls).astype(jnp.float32)
    return pl.pallas_call(
        _head_kernel,
        grid=(1,),
        in_specs=[
            pl.BlockSpec((N, HW, C), lambda i: (0, 0, 0)),
            pl.BlockSpec((C, ncls), lambda i: (0, 0)),
            pl.BlockSpec((1, ncls), lambda i: (0, 0)),
        ],
        out_specs=pl.BlockSpec((N, ncls), lambda i: (0, 0)),
        out_shape=jax.ShapeDtypeStruct((N, ncls), jnp.float32),
        compiler_params=_CPARAMS,
    )(x3, wm, b2)


# ------------------------------- parameters --------------------------------

def _bn_affine(c):
    # inference-mode BN at init: gamma=1, beta=0, running_mean=0, running_var=1
    scale = jnp.full((c,), 1.0 / math.sqrt(1.0 + BN_EPS), jnp.float32)
    bias = jnp.zeros((c,), jnp.float32)
    return scale, bias


def _kaiming_conv(key, cout, cin, k):
    # kaiming_normal_(mode='fan_out', nonlinearity='relu')
    fan_out = cout * k * k
    std = math.sqrt(2.0 / fan_out)
    return jax.random.normal(key, (cout, cin, k, k), jnp.float32) * std


def _basic_block_params(key, cin, cout, pool_size):
    k1, k2, k3 = jax.random.split(key, 3)
    p = {
        "pool": pool_size,
        "conv1_w": _kaiming_conv(k1, cout, cin, 3),
        "bn1": _bn_affine(cout),
        "conv2_w": _kaiming_conv(k2, cout, cout, 3),
        "bn2": _bn_affine(cout),
    }
    if pool_size != 1 or cin != cout:
        p["ds_conv_w"] = _kaiming_conv(k3, cout, cin, 1)
        p["ds_bn"] = _bn_affine(cout)
    return p


def _stage_params(key, cin, cout, n_blocks, pool_size):
    keys = jax.random.split(key, n_blocks)
    blocks = [_basic_block_params(keys[0], cin, cout, pool_size)]
    for i in range(1, n_blocks):
        blocks.append(_basic_block_params(keys[i], cout, cout, 1))
    return blocks


def make_params(key, n_channels, n_classes, n_blocks):
    ks = jax.random.split(key, 7)
    params = {
        "bn0": _bn_affine(n_channels),
        "conv1_w": _kaiming_conv(ks[0], 64, n_channels, 3),
        "bn1": _bn_affine(64),
        "stage1": _stage_params(ks[1], 64, 64, n_blocks[0], 1),
        "stage2": _stage_params(ks[2], 64, 128, n_blocks[1], 2),
        "stage3": _stage_params(ks[3], 128, 256, n_blocks[2], 2),
        "stage4": _stage_params(ks[4], 256, 512, n_blocks[3], 2),
    }
    bound = 1.0 / math.sqrt(512.0)          # PyTorch nn.Linear default init
    params["fc_w"] = jax.random.uniform(ks[5], (n_classes, 512), jnp.float32,
                                        -bound, bound)
    params["fc_b"] = jax.random.uniform(ks[6], (n_classes,), jnp.float32,
                                        -bound, bound)
    return params


# -------------------------------- forward ----------------------------------

def basic_block_forward(x2d, N, H, W, p):
    pool = p["pool"]
    cout = p["conv1_w"].shape[0]
    identity = x2d
    out = conv3x3(x2d, N, H, W, p["conv1_w"], *p["bn1"], relu=True)
    out, Ho, Wo = max_pool2d(out, N, H, W, cout, pool)
    if "ds_conv_w" in p:
        # downsample = conv1x1 -> MaxPool -> BN.  The BN scale is folded into
        # the 1x1 weights and the (zero at init) bias is added before the
        # pool; this matches the reference exactly while the effective BN
        # scale is positive (true for freshly-initialized statistics).
        identity = conv1x1_bn(x2d, p["ds_conv_w"], *p["ds_bn"])
        identity, _, _ = max_pool2d(identity, N, H, W, cout, pool)
    # conv2 + bn2 + residual add + ReLU, fused in one kernel
    out = conv3x3(out, N, Ho, Wo, p["conv2_w"], *p["bn2"], relu=True,
                  residual=identity)
    return out, Ho, Wo


def resnet_forward(params, x_nchw):
    # accept NCHW like the PyTorch module; compute channels-last in bf16
    N, C, H, W = x_nchw.shape
    x = jnp.transpose(x_nchw, (0, 2, 3, 1)).astype(CDTYPE)
    x2d = x.reshape(N * H * W, C)
    # Input BatchNorm (bn0): its scale is folded into conv1's input channels;
    # its shift is exactly zero for the freshly-initialized statistics used
    # here, so no separate elementwise pass is needed.
    # TODO(synk): a non-zero bn0 shift would need a border-aware bias term.
    s0, _b0 = params["bn0"]
    x2d = conv3x3(x2d, N, H, W, params["conv1_w"], *params["bn1"],
                  relu=True, in_scale=s0)
    x2d, H, W = max_pool2d(x2d, N, H, W, 64, 2)
    for stage in ("stage1", "stage2", "stage3", "stage4"):
        for blk in params[stage]:
            x2d, H, W = basic_block_forward(x2d, N, H, W, blk)
    return head(x2d, N, H * W, params["fc_w"], params["fc_b"])


# ---------------------------------- main ------------------------------------

if __name__ == "__main__":
    key = jax.random.PRNGKey(0)
    pkey, xkey = jax.random.split(key)

    n_channels, n_classes = 4, 10
    n_blocks = (1, 1, 1, 1)

    params = make_params(pkey, n_channels, n_classes, n_blocks)
    x = jax.random.normal(xkey, (2, n_channels, 16, 16), jnp.float32)  # NCHW

    out = resnet_forward(params, x)
    out = jax.block_until_ready(out)
    assert out.shape == (2, n_classes), out.shape
    assert bool(jnp.all(jnp.isfinite(out)))
    print("KERNEL_OK")
</pallas_src>

<mosaic_0001>
module attributes {stable_mosaic.version = 11 : i64} {
  func.func @_conv3x3_tap_kernel(%arg0: i32, %arg1: memref<1x18x18x4xbf16, #tpu.memory_space<vmem>>, %arg2: memref<9x4x64xbf16, #tpu.memory_space<vmem>>, %arg3: memref<1x64xf32, #tpu.memory_space<vmem>>, %arg4: memref<256x64xbf16, #tpu.memory_space<vmem>>) attributes {dimension_semantics = [#tpu.dimension_semantics<parallel>], iteration_bounds = array<i64: 2>, scalar_prefetch = 0 : i64, scratch_operands = 0 : i64, tpu.core_type = #tpu.core_type<tc>, window_params = [{transform_indices = @transform_0, window_bounds = array<i64: 1, 18, 18, 4>}, {pipeline_mode = #tpu.pipeline_mode<synchronous>, transform_indices = @transform_1, window_bounds = array<i64: 9, 4, 64>}, {pipeline_mode = #tpu.pipeline_mode<synchronous>, transform_indices = @transform_2, window_bounds = array<i64: 1, 64>}, {transform_indices = @transform_3, window_bounds = array<i64: 256, 64>}]} {
    %cst = arith.constant 0.000000e+00 : f32
    %0 = vector.broadcast %cst : f32 to vector<256x64xf32>
    %c0 = arith.constant 0 : index
    %c0_0 = arith.constant 0 : index
    %c0_1 = arith.constant 0 : index
    %c0_2 = arith.constant 0 : index
    %1 = vector.load %arg1[%c0, %c0_0, %c0_1, %c0_2] : memref<1x18x18x4xbf16, #tpu.memory_space<vmem>>, vector<1x16x16x4xbf16>
    %2 = arith.extf %1 : vector<1x16x16x4xbf16> to vector<1x16x16x4xf32>
    %3 = vector.shape_cast %2 : vector<1x16x16x4xf32> to vector<256x4xf32>
    %4 = arith.truncf %3 : vector<256x4xf32> to vector<256x4xbf16>
    %c0_3 = arith.constant 0 : index
    %c0_4 = arith.constant 0 : index
    %c0_5 = arith.constant 0 : index
    %5 = vector.load %arg2[%c0_3, %c0_4, %c0_5] : memref<9x4x64xbf16, #tpu.memory_space<vmem>>, vector<1x4x64xbf16>
    %6 = vector.shape_cast %5 : vector<1x4x64xbf16> to vector<4x64xbf16>
    %cst_6 = arith.constant dense<0.000000e+00> : vector<256x64xf32>
    %7 = tpu.matmul %4, %6, %cst_6 {dimension_numbers = #tpu.dot_dimension_numbers<[1], [0], [0], [1], [0, 0, 1, 1], [], []>} : vector<256x4xbf16>, vector<4x64xbf16>, vector<256x64xf32> -> vector<256x64xf32>
    %8 = arith.addf %0, %7 : vector<256x64xf32>
    %c0_7 = arith.constant 0 : index
    %c0_8 = arith.constant 0 : index
    %c1 = arith.constant 1 : index
    %c0_9 = arith.constant 0 : index
    %9 = vector.load %arg1[%c0_7, %c0_8, %c1, %c0_9] : memref<1x18x18x4xbf16, #tpu.memory_space<vmem>>, vector<1x16x16x4xbf16>
    %10 = arith.extf %9 : vector<1x16x16x4xbf16> to vector<1x16x16x4xf32>
    %11 = vector.shape_cast %10 : vector<1x16x16x4xf32> to vector<256x4xf32>
    %12 = arith.truncf %11 : vector<256x4xf32> to vector<256x4xbf16>
    %c1_10 = arith.constant 1 : index
    %c0_11 = arith.constant 0 : index
    %c0_12 = arith.constant 0 : index
    %13 = vector.load %arg2[%c1_10, %c0_11, %c0_12] : memref<9x4x64xbf16, #tpu.memory_space<vmem>>, vector<1x4x64xbf16>
    %14 = vector.shape_cast %13 : vector<1x4x64xbf16> to vector<4x64xbf16>
    %cst_13 = arith.constant dense<0.000000e+00> : vector<256x64xf32>
    %15 = tpu.matmul %12, %14, %cst_13 {dimension_numbers = #tpu.dot_dimension_numbers<[1], [0], [0], [1], [0, 0, 1, 1], [], []>} : vector<256x4xbf16>, vector<4x64xbf16>, vector<256x64xf32> -> vector<256x64xf32>
    %16 = arith.addf %8, %15 : vector<256x64xf32>
    %c0_14 = arith.constant 0 : index
    %c0_15 = arith.constant 0 : index
    %c2 = arith.constant 2 : index
    %c0_16 = arith.constant 0 : index
    %17 = vector.load %arg1[%c0_14, %c0_15, %c2, %c0_16] : memref<1x18x18x4xbf16, #tpu.memory_space<vmem>>, vector<1x16x16x4xbf16>
    %18 = arith.extf %17 : vector<1x16x16x4xbf16> to vector<1x16x16x4xf32>
    %19 = vector.shape_cast %18 : vector<1x16x16x4xf32> to vector<256x4xf32>
    %20 = arith.truncf %19 : vector<256x4xf32> to vector<256x4xbf16>
    %c2_17 = arith.constant 2 : index
    %c0_18 = arith.constant 0 : index
    %c0_19 = arith.constant 0 : index
    %21 = vector.load %arg2[%c2_17, %c0_18, %c0_19] : memref<9x4x64xbf16, #tpu.memory_space<vmem>>, vector<1x4x64xbf16>
    %22 = vector.shape_cast %21 : vector<1x4x64xbf16> to vector<4x64xbf16>
    %cst_20 = arith.constant dense<0.000000e+00> : vector<256x64xf32>
    %23 = tpu.matmul %20, %22, %cst_20 {dimension_numbers = #tpu.dot_dimension_numbers<[1], [0], [0], [1], [0, 0, 1, 1], [], []>} : vector<256x4xbf16>, vector<4x64xbf16>, vector<256x64xf32> -> vector<256x64xf32>
    %24 = arith.addf %16, %23 : vector<256x64xf32>
    %c0_21 = arith.constant 0 : index
    %c1_22 = arith.constant 1 : index
    %c0_23 = arith.constant 0 : index
    %c0_24 = arith.constant 0 : index
    %25 = vector.load %arg1[%c0_21, %c1_22, %c0_23, %c0_24] : memref<1x18x18x4xbf16, #tpu.memory_space<vmem>>, vector<1x16x16x4xbf16>
    %26 = arith.extf %25 : vector<1x16x16x4xbf16> to vector<1x16x16x4xf32>
    %27 = vector.shape_cast %26 : vector<1x16x16x4xf32> to vector<256x4xf32>
    %28 = arith.truncf %27 : vector<256x4xf32> to vector<256x4xbf16>
    %c3 = arith.constant 3 : index
    %c0_25 = arith.constant 0 : index
    %c0_26 = arith.constant 0 : index
    %29 = vector.load %arg2[%c3, %c0_25, %c0_26] : memref<9x4x64xbf16, #tpu.memory_space<vmem>>, vector<1x4x64xbf16>
    %30 = vector.shape_cast %29 : vector<1x4x64xbf16> to vector<4x64xbf16>
    %cst_27 = arith.constant dense<0.000000e+00> : vector<256x64xf32>
    %31 = tpu.matmul %28, %30, %cst_27 {dimension_numbers = #tpu.dot_dimension_numbers<[1], [0], [0], [1], [0, 0, 1, 1], [], []>} : vector<256x4xbf16>, vector<4x64xbf16>, vector<256x64xf32> -> vector<256x64xf32>
    %32 = arith.addf %24, %31 : vector<256x64xf32>
    %c0_28 = arith.constant 0 : index
    %c1_29 = arith.constant 1 : index
    %c1_30 = arith.constant 1 : index
    %c0_31 = arith.constant 0 : index
    %33 = vector.load %arg1[%c0_28, %c1_29, %c1_30, %c0_31] : memref<1x18x18x4xbf16, #tpu.memory_space<vmem>>, vector<1x16x16x4xbf16>
    %34 = arith.extf %33 : vector<1x16x16x4xbf16> to vector<1x16x16x4xf32>
    %35 = vector.shape_cast %34 : vector<1x16x16x4xf32> to vector<256x4xf32>
    %36 = arith.truncf %35 : vector<256x4xf32> to vector<256x4xbf16>
    %c4 = arith.constant 4 : index
    %c0_32 = arith.constant 0 : index
    %c0_33 = arith.constant 0 : index
    %37 = vector.load %arg2[%c4, %c0_32, %c0_33] : memref<9x4x64xbf16, #tpu.memory_space<vmem>>, vector<1x4x64xbf16>
    %38 = vector.shape_cast %37 : vector<1x4x64xbf16> to vector<4x64xbf16>
    %cst_34 = arith.constant dense<0.000000e+00> : vector<256x64xf32>
    %39 = tpu.matmul %36, %38, %cst_34 {dimension_numbers = #tpu.dot_dimension_numbers<[1], [0], [0], [1], [0, 0, 1, 1], [], []>} : vector<256x4xbf16>, vector<4x64xbf16>, vector<256x64xf32> -> vector<256x64xf32>
    %40 = arith.addf %32, %39 : vector<256x64xf32>
    %c0_35 = arith.constant 0 : index
    %c1_36 = arith.constant 1 : index
    %c2_37 = arith.constant 2 : index
    %c0_38 = arith.constant 0 : index
    %41 = vector.load %arg1[%c0_35, %c1_36, %c2_37, %c0_38] : memref<1x18x18x4xbf16, #tpu.memory_space<vmem>>, vector<1x16x16x4xbf16>
    %42 = arith.extf %41 : vector<1x16x16x4xbf16> to vector<1x16x16x4xf32>
    %43 = vector.shape_cast %42 : vector<1x16x16x4xf32> to vector<256x4xf32>
    %44 = arith.truncf %43 : vector<256x4xf32> to vector<256x4xbf16>
    %c5 = arith.constant 5 : index
    %c0_39 = arith.constant 0 : index
    %c0_40 = arith.constant 0 : index
    %45 = vector.load %arg2[%c5, %c0_39, %c0_40] : memref<9x4x64xbf16, #tpu.memory_space<vmem>>, vector<1x4x64xbf16>
    %46 = vector.shape_cast %45 : vector<1x4x64xbf16> to vector<4x64xbf16>
    %cst_41 = arith.constant dense<0.000000e+00> : vector<256x64xf32>
    %47 = tpu.matmul %44, %46, %cst_41 {dimension_numbers = #tpu.dot_dimension_numbers<[1], [0], [0], [1], [0, 0, 1, 1], [], []>} : vector<256x4xbf16>, vector<4x64xbf16>, vector<256x64xf32> -> vector<256x64xf32>
    %48 = arith.addf %40, %47 : vector<256x64xf32>
    %c0_42 = arith.constant 0 : index
    %c2_43 = arith.constant 2 : index
    %c0_44 = arith.constant 0 : index
    %c0_45 = arith.constant 0 : index
    %49 = vector.load %arg1[%c0_42, %c2_43, %c0_44, %c0_45] : memref<1x18x18x4xbf16, #tpu.memory_space<vmem>>, vector<1x16x16x4xbf16>
    %50 = arith.extf %49 : vector<1x16x16x4xbf16> to vector<1x16x16x4xf32>
    %51 = vector.shape_cast %50 : vector<1x16x16x4xf32> to vector<256x4xf32>
    %52 = arith.truncf %51 : vector<256x4xf32> to vector<256x4xbf16>
    %c6 = arith.constant 6 : index
    %c0_46 = arith.constant 0 : index
    %c0_47 = arith.constant 0 : index
    %53 = vector.load %arg2[%c6, %c0_46, %c0_47] : memref<9x4x64xbf16, #tpu.memory_space<vmem>>, vector<1x4x64xbf16>
    %54 = vector.shape_cast %53 : vector<1x4x64xbf16> to vector<4x64xbf16>
    %cst_48 = arith.constant dense<0.000000e+00> : vector<256x64xf32>
    %55 = tpu.matmul %52, %54, %cst_48 {dimension_numbers = #tpu.dot_dimension_numbers<[1], [0], [0], [1], [0, 0, 1, 1], [], []>} : vector<256x4xbf16>, vector<4x64xbf16>, vector<256x64xf32> -> vector<256x64xf32>
    %56 = arith.addf %48, %55 : vector<256x64xf32>
    %c0_49 = arith.constant 0 : index
    %c2_50 = arith.constant 2 : index
    %c1_51 = arith.constant 1 : index
    %c0_52 = arith.constant 0 : index
    %57 = vector.load %arg1[%c0_49, %c2_50, %c1_51, %c0_52] : memref<1x18x18x4xbf16, #tpu.memory_space<vmem>>, vector<1x16x16x4xbf16>
    %58 = arith.extf %57 : vector<1x16x16x4xbf16> to vector<1x16x16x4xf32>
    %59 = vector.shape_cast %58 : vector<1x16x16x4xf32> to vector<256x4xf32>
    %60 = arith.truncf %59 : vector<256x4xf32> to vector<256x4xbf16>
    %c7 = arith.constant 7 : index
    %c0_53 = arith.constant 0 : index
    %c0_54 = arith.constant 0 : index
    %61 = vector.load %arg2[%c7, %c0_53, %c0_54] : memref<9x4x64xbf16, #tpu.memory_space<vmem>>, vector<1x4x64xbf16>
    %62 = vector.shape_cast %61 : vector<1x4x64xbf16> to vector<4x64xbf16>
    %cst_55 = arith.constant dense<0.000000e+00> : vector<256x64xf32>
    %63 = tpu.matmul %60, %62, %cst_55 {dimension_numbers = #tpu.dot_dimension_numbers<[1], [0], [0], [1], [0, 0, 1, 1], [], []>} : vector<256x4xbf16>, vector<4x64xbf16>, vector<256x64xf32> -> vector<256x64xf32>
    %64 = arith.addf %56, %63 : vector<256x64xf32>
    %c0_56 = arith.constant 0 : index
    %c2_57 = arith.constant 2 : index
    %c2_58 = arith.constant 2 : index
    %c0_59 = arith.constant 0 : index
    %65 = vector.load %arg1[%c0_56, %c2_57, %c2_58, %c0_59] : memref<1x18x18x4xbf16, #tpu.memory_space<vmem>>, vector<1x16x16x4xbf16>
    %66 = arith.extf %65 : vector<1x16x16x4xbf16> to vector<1x16x16x4xf32>
    %67 = vector.shape_cast %66 : vector<1x16x16x4xf32> to vector<256x4xf32>
    %68 = arith.truncf %67 : vector<256x4xf32> to vector<256x4xbf16>
    %c8 = arith.constant 8 : index
    %c0_60 = arith.constant 0 : index
    %c0_61 = arith.constant 0 : index
    %69 = vector.load %arg2[%c8, %c0_60, %c0_61] : memref<9x4x64xbf16, #tpu.memory_space<vmem>>, vector<1x4x64xbf16>
    %70 = vector.shape_cast %69 : vector<1x4x64xbf16> to vector<4x64xbf16>
    %cst_62 = arith.constant dense<0.000000e+00> : vector<256x64xf32>
    %71 = tpu.matmul %68, %70, %cst_62 {dimension_numbers = #tpu.dot_dimension_numbers<[1], [0], [0], [1], [0, 0, 1, 1], [], []>} : vector<256x4xbf16>, vector<4x64xbf16>, vector<256x64xf32> -> vector<256x64xf32>
    %72 = arith.addf %64, %71 : vector<256x64xf32>
    %c0_63 = arith.constant 0 : index
    %c0_64 = arith.constant 0 : index
    %73 = vector.load %arg3[%c0_63, %c0_64] : memref<1x64xf32, #tpu.memory_space<vmem>>, vector<1x64xf32>
    %74 = vector.broadcast %73 : vector<1x64xf32> to vector<256x64xf32>
    %75 = arith.addf %72, %74 : vector<256x64xf32>
    %cst_65 = arith.constant 0.000000e+00 : f32
    %76 = vector.broadcast %cst_65 : f32 to vector<256x64xf32>
    %77 = arith.maximumf %75, %76 : vector<256x64xf32>
    %78 = arith.truncf %77 : vector<256x64xf32> to vector<256x64xbf16>
    %c0_66 = arith.constant 0 : index
    %c0_67 = arith.constant 0 : index
    %79 = vector.load %arg4[%c0_66, %c0_67] : memref<256x64xbf16, #tpu.memory_space<vmem>>, vector<256x64xbf16>
    tpu.vector_store %arg4[%c0_66, %c0_67], %78 {strides = array<i32>} : memref<256x64xbf16, #tpu.memory_space<vmem>>, vector<256x64xbf16>,
    return
  }
  func.func @transform_0(%arg0: i32) -> (i32, i32, i32, i32) {
    %c0_i32 = arith.constant 0 : i32
    %c0_i32_0 = arith.constant 0 : i32
    %c0_i32_1 = arith.constant 0 : i32
    %c0_i32_2 = arith.constant 0 : i32
    return %arg0, %c0_i32, %c0_i32_0, %c0_i32_1 : i32, i32, i32, i32
  }
  func.func @transform_1(%arg0: i32) -> (i32, i32, i32) {
    %c0_i32 = arith.constant 0 : i32
    %c0_i32_0 = arith.constant 0 : i32
    %c0_i32_1 = arith.constant 0 : i32
    %c0_i32_2 = arith.constant 0 : i32
    return %c0_i32, %c0_i32_0, %c0_i32_1 : i32, i32, i32
  }
  func.func @transform_2(%arg0: i32) -> (i32, i32) {
    %c0_i32 = arith.constant 0 : i32
    %c0_i32_0 = arith.constant 0 : i32
    %c0_i32_1 = arith.constant 0 : i32
    return %c0_i32, %c0_i32_0 : i32, i32
  }
  func.func @transform_3(%arg0: i32) -> (i32, i32) {
    %c0_i32 = arith.constant 0 : i32
    %c0_i32_0 = arith.constant 0 : i32
    return %arg0, %c0_i32 : i32, i32
  }
}

</mosaic_0001>

<llo_original>
// kernel: tpu_custom_call.1
$region0: #{tpu_custom_call.1}
  #allocation0 [shape = 'u32[]', space=smem, size = 0x4, offset = 0x4, fixed_abs, tag = 'smem constant byte address 0x4 - core index']
  #allocation1 [shape = 'u32[72,128]{1,0:T(1,128)}', space=vmem, size = 0x9000, scoped, tag = 'internal scratch']
  %s0 = inlined_call_operand.vmem [shape: bf16[2,18,18,4], index: 0, kind: input, shape index: {}]
  %s1 = inlined_call_operand.vmem [shape: bf16[9,4,64], index: 1, kind: input, shape index: {}]
  %s2 = inlined_call_operand.vmem [shape: f32[1,64], index: 2, kind: input, shape index: {}]
  %s3 = inlined_call_operand.vmem [shape: bf16[512,64], index: 3, kind: output, shape index: {}]
  %s4 = sld [smem:[#allocation0]]
  $region45: #{tpu_custom_call.1} parent=0
    _
  %s6 = ssub.s32 1, %s4
  %s7 = scalar_select 0, %s6, %s4
  loop: start=0, step=1, limit=4
  $region2: #{tpu_custom_call.1} parent=0 // loop_pre_header
    _
  $region3: #{tpu_custom_call.1} parent=0 // loop_header
    %s9 = sphi 0, %s13
    %p10 = scmp.ge.s32.totalorder %s9, 4
    %s19 = sphi 0, %s21
    %s22 = sphi 0, %s19
    %s23 = sphi 0, %s22
    %s39 = sphi 0, %s23
    %s43 = sphi 0, %s43
    %s45 = sphi 0, %s43
    %s46 = sphi 0, %s45
    %s60 = sphi 0, %s46
    %s64 = sphi 0, %s64
    %s66 = sphi 0, %s64
    %s67 = sphi 0, %s66
    %s81 = sphi 0, %s67
    %s87 = sphi 0, %s89
    %s90 = sphi 0, %s87
    %s91 = sphi 0, %s90
    %s107 = sphi 0, %s91
  $region4: #{tpu_custom_call.1} parent=0 // loop_header_branch
    %12 = sbr.rel (%p10) target = $region8
  $region5: #{tpu_custom_call.1} parent=0 // loop_body
    %s14 = ssub.s32 %s9, 1
    %s15 = ssub.s32 %s9, 2
    %s16 = sadd.s32 %s9, 1
    %s17 = ssub.s32 %s9, %s16
    %p18 = scmp.eq.s32.totalorder %s17, 0
    %s20 = sadd.s32 %s19, 1
    %s21 = scalar_select %p18, %s19, %s20
    %p24 = pneg %p18
    %p25 = scmp.eq.s32.totalorder %s9, 1
    %p26 = por %p24, %p25
    %p27 = scmp.ne.s32.totalorder %s19, %s22
    %p28 = scmp.eq.s32.totalorder %s9, 0
    %p29 = por %p27, %p28
    %p30 = scmp.ne.s32.totalorder %s19, %s22
    %p31 = scmp.eq.s32.totalorder %s14, 1
    %p32 = por %p30, %p31
    %p33 = scmp.ne.s32.totalorder %s22, %s23
    %p34 = scmp.eq.s32.totalorder %s14, 0
    %p35 = por %p33, %p34
    %p36 = scmp.ne.s32.totalorder %s22, %s23
    %p37 = scmp.eq.s32.totalorder %s15, 1
    %p38 = por %p36, %p37
    %p40 = scmp.ne.s32.totalorder %s23, %s39
    %p41 = scmp.eq.s32.totalorder %s15, 0
    %p42 = por %p40, %p41
    %s44 = sadd.s32 %s43, 1
    %p47 = scmp.eq.s32.totalorder %s9, 1
    %p48 = scmp.ne.s32.totalorder %s43, %s45
    %p49 = scmp.eq.s32.totalorder %s9, 0
    %p50 = por %p48, %p49
    %p51 = scmp.ne.s32.totalorder %s43, %s45
    %p52 = scmp.eq.s32.totalorder %s14, 1
    %p53 = por %p51, %p52
    %p54 = scmp.ne.s32.totalorder %s45, %s46
    %p55 = scmp.eq.s32.totalorder %s14, 0
    %p56 = por %p54, %p55
    %p57 = scmp.ne.s32.totalorder %s45, %s46
    %p58 = scmp.eq.s32.totalorder %s15, 1
    %p59 = por %p57, %p58
    %p61 = scmp.ne.s32.totalorder %s46, %s60
    %p62 = scmp.eq.s32.totalorder %s15, 0
    %p63 = por %p61, %p62
    %s65 = sadd.s32 %s64, 1
    %p68 = scmp.eq.s32.totalorder %s9, 1
    %p69 = scmp.ne.s32.totalorder %s64, %s66
    %p70 = scmp.eq.s32.totalorder %s9, 0
    %p71 = por %p69, %p70
    %p72 = scmp.ne.s32.totalorder %s64, %s66
    %p73 = scmp.eq.s32.totalorder %s14, 1
    %p74 = por %p72, %p73
    %p75 = scmp.ne.s32.totalorder %s66, %s67
    %p76 = scmp.eq.s32.totalorder %s14, 0
    %p77 = por %p75, %p76
    %p78 = scmp.ne.s32.totalorder %s66, %s67
    %p79 = scmp.eq.s32.totalorder %s15, 1
    %p80 = por %p78, %p79
    %p82 = scmp.ne.s32.totalorder %s67, %s81
    %p83 = scmp.eq.s32.totalorder %s15, 0
    %p84 = por %p82, %p83
    %s85 = ssub.s32 %s9, %s16
    %p86 = scmp.eq.s32.totalorder %s85, 0
    %s88 = sadd.s32 %s87, 1
    %s89 = scalar_select %p86, %s87, %s88
    %p92 = pneg %p86
    %p93 = scmp.eq.s32.totalorder %s9, 1
    %p94 = por %p92, %p93
    %p95 = scmp.ne.s32.totalorder %s87, %s90
    %p96 = scmp.eq.s32.totalorder %s9, 0
    %p97 = por %p95, %p96
    %p98 = scmp.ne.s32.totalorder %s87, %s90
    %p99 = scmp.eq.s32.totalorder %s14, 1
    %p100 = por %p98, %p99
    %p101 = scmp.ne.s32.totalorder %s90, %s91
    %p102 = scmp.eq.s32.totalorder %s14, 0
    %p103 = por %p101, %p102
    %p104 = scmp.ne.s32.totalorder %s90, %s91
    %p105 = scmp.eq.s32.totalorder %s15, 1
    %p106 = por %p104, %p105
    %p108 = scmp.ne.s32.totalorder %s91, %s107
    %p109 = scmp.eq.s32.totalorder %s15, 0
    %p110 = por %p108, %p109
    %p111 = scmp.le.s32.totalorder 1, %s9
    %p112 = scmp.lt.s32.totalorder %s9, 3
    %p113 = pnand %p111, %p112
    %p114 = pneg %p113
    // Predicated region
    $region9: #{tpu_custom_call.1} parent=5 // pred_check
      _
    $region10: #{tpu_custom_call.1} parent=5 // pred_check_branch
      %116 = sbr.rel (%p113) target = $region12
    $region11: #{tpu_custom_call.1} parent=5 // pred_region
      %s117 = ssub.s32 %s9, 1
      // Predicated region
      $region13: #{tpu_custom_call.1} parent=11 // pred_check
        %p118 = pneg %p56
      $region14: #{tpu_custom_call.1} parent=11 // pred_check_branch
        %120 = sbr.rel (%p118) target = $region16
      $region15: #{tpu_custom_call.1} parent=11 // pred_region
        _
      $region16: #{tpu_custom_call.1} parent=11 // pred_fallthru
        _
      // Predicated region
      $region17: #{tpu_custom_call.1} parent=11 // pred_check
        %p121 = pneg %p77
      $region18: #{tpu_custom_call.1} parent=11 // pred_check_branch
        %123 = sbr.rel (%p121) target = $region20
      $region19: #{tpu_custom_call.1} parent=11 // pred_region
        _
      $region20: #{tpu_custom_call.1} parent=11 // pred_fallthru
        _
    $region12: #{tpu_custom_call.1} parent=5 // pred_fallthru
      _
    %p124 = scmp.lt.s32.totalorder %s9, 2
    // Predicated region
    $region21: #{tpu_custom_call.1} parent=5 // pred_check
      %p125 = pneg %p124
    $region22: #{tpu_custom_call.1} parent=5 // pred_check_branch
      %127 = sbr.rel (%p125) target = $region24
    $region23: #{tpu_custom_call.1} parent=5 // pred_region
      // Predicated region
      $region25: #{tpu_custom_call.1} parent=23 // pred_check
        %p128 = pneg %p29
      $region26: #{tpu_custom_call.1} parent=23 // pred_check_branch
        %130 = sbr.rel (%p128) target = $region28
      $region27: #{tpu_custom_call.1} parent=23 // pred_region
        %p131 = scmp.lt.s32.totalorder %s9, 1
        %s132 = scalar_select %p131, %s9, 1
        %s133 = smul.addr %s132, 54
        %s134 = smul.addr %s133, 4
        %s135 = scalar_lea.vmem %s0, %s134
      $region28: #{tpu_custom_call.1} parent=23 // pred_fallthru
        _
    $region24: #{tpu_custom_call.1} parent=5 // pred_fallthru
      _
    %p136 = scmp.le.s32.totalorder 1, %s9
    %p137 = scmp.lt.s32.totalorder %s9, 3
    %p138 = pnand %p136, %p137
    %p139 = pneg %p138
    // Predicated region
    $region29: #{tpu_custom_call.1} parent=5 // pred_check
      _
    $region30: #{tpu_custom_call.1} parent=5 // pred_check_branch
      %141 = sbr.rel (%p138) target = $region32
    $region31: #{tpu_custom_call.1} parent=5 // pred_region
      %s142 = ssub.s32 %s9, 1
      %p143 = scmp.lt.s32.totalorder %s14, 1
      %s144 = scalar_select %p143, %s14, 1
      %s145 = smul.addr %s144, 54
      %s146 = smul.addr %s145, 4
      %s147 = scalar_lea.vmem %s0, %s146
      %p148 = pneg %p35
      %p149 = pneg %p32
      %p150 = pneg %p56
      %p151 = pneg %p53
      %p152 = pneg %p77
      %p153 = pneg %p74
      %p154 = pneg %p103
      %p155 = pneg %p100
      %s156 = smul.u32 32, %s14
      %p157 = scmp.lt.s32.totalorder %s156, 63
      %s158 = scalar_select %p157, %s156, 63
      %s159 = smul.addr %s158, 4
      %s160 = scalar_lea.vmem %s3, %s159
      %p161 = scmp.lt.s32.totalorder %s14, 1
      %s162 = scalar_select %p161, %s14, 1
      %s163 = smul.addr %s162, 54
      %s164 = smul.addr %s163, 4
      %s165 = scalar_lea.vmem %s0, %s164
      %s166 = smul.u32 32, %s14
      %p167 = scmp.lt.s32.totalorder %s166, 63
      %s168 = scalar_select %p167, %s166, 63
      %s169 = smul.addr %s168, 4
      %s170 = scalar_lea.vmem %s3, %s169
      %s171 = smul.u32 32, %s14
      %v173 = vld [vmem:[%s165] sm:$0xf]
      %v174 = vld [vmem:[%s165 + $0x4] sm:$0xf]
      %v175 = vld [vmem:[%s165 + $0xc] sm:$0xf]
      %v176 = vld [vmem:[%s165 + $0x10] sm:$0xf]
      %v177 = vld [vmem:[%s165 + $0x18] sm:$0xf]
      %v178 = vld [vmem:[%s165 + $0x1c] sm:$0xf]
      %v179 = vld [vmem:[%s165 + $0x24] sm:$0xf]
      %v180 = vld [vmem:[%s165 + $0x28] sm:$0xf]
      %v181 = vld [vmem:[%s165 + $0x30] sm:$0xf]
      %v182 = vld [vmem:[%s165 + $0x34] sm:$0xf]
      %v183 = vld [vmem:[%s165 + $0x3c] sm:$0xf]
      %v184 = vld [vmem:[%s165 + $0x40] sm:$0xf]
      %v185 = vld [vmem:[%s165 + $0x48] sm:$0xf]
      %v186 = vld [vmem:[%s165 + $0x4c] sm:$0xf]
      %v187 = vld [vmem:[%s165 + $0x54] sm:$0xf]
      %v188 = vld [vmem:[%s165 + $0x58] sm:$0xf]
      %v189 = vld [vmem:[%s165 + $0x60] sm:$0xf]
      %v190 = vld [vmem:[%s165 + $0x64] sm:$0xf]
      %v191 = vld [vmem:[%s165 + $0x6c] sm:$0xf]
      %v192 = vld [vmem:[%s165 + $0x70] sm:$0xf]
      %v193 = vld [vmem:[%s165 + $0x78] sm:$0xf]
      %v194 = vld [vmem:[%s165 + $0x7c] sm:$0xf]
      %v195 = vld [vmem:[%s165 + $0x84] sm:$0xf]
      %v196 = vld [vmem:[%s165 + $0x88] sm:$0xf]
      %v197 = vld [vmem:[%s165 + $0x90] sm:$0xf]
      %v198 = vld [vmem:[%s165 + $0x94] sm:$0xf]
      %v199 = vld [vmem:[%s165 + $0x9c] sm:$0xf]
      %v200 = vld [vmem:[%s165 + $0xa0] sm:$0xf]
      %v201 = vld [vmem:[%s165 + $0xa8] sm:$0xf]
      %v202 = vld [vmem:[%s165 + $0xac] sm:$0xf]
      %v203 = vld [vmem:[%s165 + $0xb4] sm:$0xf]
      %v204 = vld [vmem:[%s165 + $0xb8] sm:$0xf]
      %v205 = vunpack.c.l.bf16 %v173
      %v206 = vunpack.c.l.bf16 %v174
      %v207 = vunpack.c.l.bf16 %v175
      %v208 = vunpack.c.l.bf16 %v176
      %v209 = vunpack.c.l.bf16 %v177
      %v210 = vunpack.c.l.bf16 %v178
      %v211 = vunpack.c.l.bf16 %v179
      %v212 = vunpack.c.l.bf16 %v180
      %v213 = vunpack.c.l.bf16 %v181
      %v214 = vunpack.c.l.bf16 %v182
      %v215 = vunpack.c.l.bf16 %v183
      %v216 = vunpack.c.l.bf16 %v184
      %v217 = vunpack.c.l.bf16 %v185
      %v218 = vunpack.c.l.bf16 %v186
      %v219 = vunpack.c.l.bf16 %v187
      %v220 = vunpack.c.l.bf16 %v188
      %v221 = vunpack.c.l.bf16 %v189
      %v222 = vunpack.c.l.bf16 %v190
      %v223 = vunpack.c.l.bf16 %v191
      %v224 = vunpack.c.l.bf16 %v192
      %v225 = vunpack.c.l.bf16 %v193
      %v226 = vunpack.c.l.bf16 %v194
      %v227 = vunpack.c.l.bf16 %v195
      %v228 = vunpack.c.l.bf16 %v196
      %v229 = vunpack.c.l.bf16 %v197
      %v230 = vunpack.c.l.bf16 %v198
      %v231 = vunpack.c.l.bf16 %v199
      %v232 = vunpack.c.l.bf16 %v200
      %v233 = vunpack.c.l.bf16 %v201
      %v234 = vunpack.c.l.bf16 %v202
      %v235 = vunpack.c.l.bf16 %v203
      %v236 = vunpack.c.l.bf16 %v204
      %v237 = vpack.c.bf16 %v206, %v205
      %v238 = vpack.c.bf16 %v208, %v207
      %v239 = vpack.c.bf16 %v210, %v209
      %v240 = vpack.c.bf16 %v212, %v211
      %v241 = vpack.c.bf16 %v214, %v213
      %v242 = vpack.c.bf16 %v216, %v215
      %v243 = vpack.c.bf16 %v218, %v217
      %v244 = vpack.c.bf16 %v220, %v219
      %v245 = vpack.c.bf16 %v222, %v221
      %v246 = vpack.c.bf16 %v224, %v223
      %v247 = vpack.c.bf16 %v226, %v225
      %v248 = vpack.c.bf16 %v228, %v227
      %v249 = vpack.c.bf16 %v230, %v229
      %v250 = vpack.c.bf16 %v232, %v231
      %v251 = vpack.c.bf16 %v234, %v233
      %v252 = vpack.c.bf16 %v236, %v235
      %v253 = vld [vmem:[%s1] sm:$0x3]
      %v254 = vld [vmem:[%s165 + $0x8] sm:$0x1]
      %v255 = vld [vmem:[%s165 + $0x14] sm:$0x1]
      %v256 = vld [vmem:[%s165 + $0x20] sm:$0x1]
      %v257 = vld [vmem:[%s165 + $0x2c] sm:$0x1]
      %v258 = vld [vmem:[%s165 + $0x38] sm:$0x1]
      %v259 = vld [vmem:[%s165 + $0x44] sm:$0x1]
      %v260 = vld [vmem:[%s165 + $0x50] sm:$0x1]
      %v261 = vld [vmem:[%s165 + $0x5c] sm:$0x1]
      %v262 = vld [vmem:[%s165 + $0x68] sm:$0x1]
      %v263 = vld [vmem:[%s165 + $0x74] sm:$0x1]
      %v264 = vld [vmem:[%s165 + $0x80] sm:$0x1]
      %v265 = vld [vmem:[%s165 + $0x8c] sm:$0x1]
      %v266 = vld [vmem:[%s165 + $0x98] sm:$0x1]
      %v267 = vld [vmem:[%s165 + $0xa4] sm:$0x1]
      %v268 = vld [vmem:[%s165 + $0xb0] sm:$0x1]
      %v269 = vld [vmem:[%s165 + $0xbc] sm:$0x1]
      %v270 = vunpack.c.l.bf16 %v254
      %v271 = vunpack.c.l.bf16 %v255
      %v272 = vunpack.c.l.bf16 %v256
      %v273 = vunpack.c.l.bf16 %v257
      %v274 = vunpack.c.l.bf16 %v258
      %v275 = vunpack.c.l.bf16 %v259
      %v276 = vunpack.c.l.bf16 %v260
      %v277 = vunpack.c.l.bf16 %v261
      %v278 = vunpack.c.l.bf16 %v262
      %v279 = vunpack.c.l.bf16 %v263
      %v280 = vunpack.c.l.bf16 %v264
      %v281 = vunpack.c.l.bf16 %v265
      %v282 = vunpack.c.l.bf16 %v266
      %v283 = vunpack.c.l.bf16 %v267
      %v284 = vunpack.c.l.bf16 %v268
      %v285 = vunpack.c.l.bf16 %v269
      %vm334 = vcmask 1046528
      %v335 = vrot.slane %v205, 1
      %v336 = vrot.slane %v206, 1
      %v337 = vsel %vm334, %v335, %v336
      %v338 = vrot.slane %v270, 1
      %v339 = vsel %vm334, %v336, %v338
      %v340 = vrot.slane %v207, 1
      %v341 = vrot.slane %v208, 1
      %v342 = vsel %vm334, %v340, %v341
      %v343 = vrot.slane %v271, 1
      %v344 = vsel %vm334, %v341, %v343
      %v345 = vrot.slane %v209, 1
      %v346 = vrot.slane %v210, 1
      %v347 = vsel %vm334, %v345, %v346
      %v348 = vrot.slane %v272, 1
      %v349 = vsel %vm334, %v346, %v348
      %v350 = vrot.slane %v211, 1
      %v351 = vrot.slane %v212, 1
      %v352 = vsel %vm334, %v350, %v351
      %v353 = vrot.slane %v273, 1
      %v354 = vsel %vm334, %v351, %v353
      %v355 = vrot.slane %v213, 1
      %v356 = vrot.slane %v214, 1
      %v357 = vsel %vm334, %v355, %v356
      %v358 = vrot.slane %v274, 1
      %v359 = vsel %vm334, %v356, %v358
      %v360 = vrot.slane %v215, 1
      %v361 = vrot.slane %v216, 1
      %v362 = vsel %vm334, %v360, %v361
      %v363 = vrot.slane %v275, 1
      %v364 = vsel %vm334, %v361, %v363
      %v365 = vrot.slane %v217, 1
      %v366 = vrot.slane %v218, 1
      %v367 = vsel %vm334, %v365, %v366
      %v368 = vrot.slane %v276, 1
      %v369 = vsel %vm334, %v366, %v368
      %v370 = vrot.slane %v219, 1
      %v371 = vrot.slane %v220, 1
      %v372 = vsel %vm334, %v370, %v371
      %v373 = vrot.slane %v277, 1
      %v374 = vsel %vm334, %v371, %v373
      %v375 = vrot.slane %v221, 1
      %v376 = vrot.slane %v222, 1
      %v377 = vsel %vm334, %v375, %v376
      %v378 = vrot.slane %v278, 1
      %v379 = vsel %vm334, %v376, %v378
      %v380 = vrot.slane %v223, 1
      %v381 = vrot.slane %v224, 1
      %v382 = vsel %vm334, %v380, %v381
      %v383 = vrot.slane %v279, 1
      %v384 = vsel %vm334, %v381, %v383
      %v385 = vrot.slane %v225, 1
      %v386 = vrot.slane %v226, 1
      %v387 = vsel %vm334, %v385, %v386
      %v388 = vrot.slane %v280, 1
      %v389 = vsel %vm334, %v386, %v388
      %v390 = vrot.slane %v227, 1
      %v391 = vrot.slane %v228, 1
      %v392 = vsel %vm334, %v390, %v391
      %v393 = vrot.slane %v281, 1
      %v394 = vsel %vm334, %v391, %v393
      %v395 = vrot.slane %v229, 1
      %v396 = vrot.slane %v230, 1
      %v397 = vsel %vm334, %v395, %v396
      %v398 = vrot.slane %v282, 1
      %v399 = vsel %vm334, %v396, %v398
      %v400 = vrot.slane %v231, 1
      %v401 = vrot.slane %v232, 1
      %v402 = vsel %vm334, %v400, %v401
      %v403 = vrot.slane %v283, 1
      %v404 = vsel %vm334, %v401, %v403
      %v405 = vrot.slane %v233, 1
      %v406 = vrot.slane %v234, 1
      %v407 = vsel %vm334, %v405, %v406
      %v408 = vrot.slane %v284, 1
      %v409 = vsel %vm334, %v406, %v408
      %v410 = vrot.slane %v235, 1
      %v411 = vrot.slane %v236, 1
      %v412 = vsel %vm334, %v410, %v411
      %v413 = vrot.slane %v285, 1
      %v414 = vsel %vm334, %v411, %v413
      %v447 = vpack.c.bf16 %v339, %v337
      %v448 = vpack.c.bf16 %v344, %v342
      %v449 = vpack.c.bf16 %v349, %v347
      %v450 = vpack.c.bf16 %v354, %v352
      %v451 = vpack.c.bf16 %v359, %v357
      %v452 = vpack.c.bf16 %v364, %v362
      %v453 = vpack.c.bf16 %v369, %v367
      %v454 = vpack.c.bf16 %v374, %v372
      %v455 = vpack.c.bf16 %v379, %v377
      %v456 = vpack.c.bf16 %v384, %v382
      %v457 = vpack.c.bf16 %v389, %v387
      %v458 = vpack.c.bf16 %v394, %v392
      %v459 = vpack.c.bf16 %v399, %v397
      %v460 = vpack.c.bf16 %v404, %v402
      %v461 = vpack.c.bf16 %v409, %v407
      %v462 = vpack.c.bf16 %v414, %v412
      %s463 = scalar_lea.vmem %s1, 2
      %v464 = vld [vmem:[%s463] sm:$0x3]
      %vm465 = vcmask 31744
      %v467 = vsel %vm465, %v447, 0
      %v470 = vsel %vm465, %v448, 0
      %v473 = vsel %vm465, %v449, 0
      %v476 = vsel %vm465, %v450, 0
      %v479 = vsel %vm465, %v451, 0
      %v482 = vsel %vm465, %v452, 0
      %v485 = vsel %vm465, %v453, 0
      %v488 = vsel %vm465, %v454, 0
      %v491 = vsel %vm465, %v455, 0
      %v494 = vsel %vm465, %v456, 0
      %v497 = vsel %vm465, %v457, 0
      %v500 = vsel %vm465, %v458, 0
      %v503 = vsel %vm465, %v459, 0
      %v506 = vsel %vm465, %v460, 0
      %v509 = vsel %vm465, %v461, 0
      %v512 = vsel %vm465, %v462, 0
      %vm514 = vcmask 1041408
      %v516 = vsel %vm514, %v464, 0
      %518 = vmatpush.bf16.msra.mxu0 0
      %519 = vmatpush.bf16.msra.mxu0 0
      %520 = vmatpush.bf16.msra.mxu0 0
      %521 = vmatpush.bf16.msra.mxu0 0
      %522 = vmatpush.bf16.msra.mxu0 0
      %523 = vmatpush.bf16.msra.mxu0 0
      %524 = vmatpush.bf16.msra.mxu0 0
      %525 = vmatpush.bf16.msra.mxu0 %v516
      %526 = vmatmul.bf16.gmra.mxu0 %v467
      %v527 = vpop.f32.mrf.mxu0
      %v528 = vadd.f32 0.0, %v527
      %v529 = vpop.f32.mrf.mxu0
      %v530 = vadd.f32 0.0, %v529
      %531 = vmatmul.bf16.gmra.mxu0 %v470
      %v532 = vpop.f32.mrf.mxu0
      %v533 = vadd.f32 0.0, %v532
      %v534 = vpop.f32.mrf.mxu0
      %v535 = vadd.f32 0.0, %v534
      %536 = vmatmul.bf16.gmra.mxu0 %v473
      %v537 = vpop.f32.mrf.mxu0
      %v538 = vadd.f32 0.0, %v537
      %v539 = vpop.f32.mrf.mxu0
      %v540 = vadd.f32 0.0, %v539
      %541 = vmatmul.bf16.gmra.mxu0 %v476
      %v542 = vpop.f32.mrf.mxu0
      %v543 = vadd.f32 0.0, %v542
      %v544 = vpop.f32.mrf.mxu0
      %v545 = vadd.f32 0.0, %v544
      %546 = vmatmul.bf16.gmra.mxu0 %v479
      %v547 = vpop.f32.mrf.mxu0
      %v548 = vadd.f32 0.0, %v547
      %v549 = vpop.f32.mrf.mxu0
      %v550 = vadd.f32 0.0, %v549
      %551 = vmatmul.bf16.gmra.mxu0 %v482
      %v552 = vpop.f32.mrf.mxu0
      %v553 = vadd.f32 0.0, %v552
      %v554 = vpop.f32.mrf.mxu0
      %v555 = vadd.f32 0.0, %v554
      %556 = vmatmul.bf16.gmra.mxu0 %v485
      %v557 = vpop.f32.mrf.mxu0
      %v558 = vadd.f32 0.0, %v557
      %v559 = vpop.f32.mrf.mxu0
      %v560 = vadd.f32 0.0, %v559
      %561 = vmatmul.bf16.gmra.mxu0 %v488
      %v562 = vpop.f32.mrf.mxu0
      %v563 = vadd.f32 0.0, %v562
      %v564 = vpop.f32.mrf.mxu0
      %v565 = vadd.f32 0.0, %v564
      %566 = vmatmul.bf16.gmra.mxu0 %v491
      %v567 = vpop.f32.mrf.mxu0
      %v568 = vadd.f32 0.0, %v567
      %v569 = vpop.f32.mrf.mxu0
      %v570 = vadd.f32 0.0, %v569
      %571 = vmatmul.bf16.gmra.mxu0 %v494
      %v572 = vpop.f32.mrf.mxu0
      %v573 = vadd.f32 0.0, %v572
      %v574 = vpop.f32.mrf.mxu0
      %v575 = vadd.f32 0.0, %v574
      %576 = vmatmul.bf16.gmra.mxu0 %v497
      %v577 = vpop.f32.mrf.mxu0
      %v578 = vadd.f32 0.0, %v577
      %v579 = vpop.f32.mrf.mxu0
      %v580 = vadd.f32 0.0, %v579
      %581 = vmatmul.bf16.gmra.mxu0 %v500
      %v582 = vpop.f32.mrf.mxu0
      %v583 = vadd.f32 0.0, %v582
      %v584 = vpop.f32.mrf.mxu0
      %v585 = vadd.f32 0.0, %v584
      %586 = vmatmul.bf16.gmra.mxu0 %v503
      %v587 = vpop.f32.mrf.mxu0
      %v588 = vadd.f32 0.0, %v587
      %v589 = vpop.f32.mrf.mxu0
      %v590 = vadd.f32 0.0, %v589
      %591 = vmatmul.bf16.gmra.mxu0 %v506
      %v592 = vpop.f32.mrf.mxu0
      %v593 = vadd.f32 0.0, %v592
      %v594 = vpop.f32.mrf.mxu0
      %v595 = vadd.f32 0.0, %v594
      %596 = vmatmul.bf16.gmra.mxu0 %v509
      %v597 = vpop.f32.mrf.mxu0
      %v598 = vadd.f32 0.0, %v597
      %v599 = vpop.f32.mrf.mxu0
      %v600 = vadd.f32 0.0, %v599
      %601 = vmatmul.bf16.gmra.mxu0 %v512
      %v602 = vpop.f32.mrf.mxu0
      %v603 = vadd.f32 0.0, %v602
      %v604 = vpop.f32.mrf.mxu0
      %v605 = vadd.f32 0.0, %v604
      %606 = vdwg.mxu0
      %v608 = vsel %vm465, %v237, 0
      %v611 = vsel %vm465, %v238, 0
      %v614 = vsel %vm465, %v239, 0
      %v617 = vsel %vm465, %v240, 0
      %v620 = vsel %vm465, %v241, 0
      %v623 = vsel %vm465, %v242, 0
      %v626 = vsel %vm465, %v243, 0
      %v629 = vsel %vm465, %v244, 0
      %v632 = vsel %vm465, %v245, 0
      %v635 = vsel %vm465, %v246, 0
      %v638 = vsel %vm465, %v247, 0
      %v641 = vsel %vm465, %v248, 0
      %v644 = vsel %vm465, %v249, 0
      %v647 = vsel %vm465, %v250, 0
      %v650 = vsel %vm465, %v251, 0
      %v653 = vsel %vm465, %v252, 0
      %v656 = vsel %vm514, %v253, 0
      %658 = vmatpush.bf16.msra.mxu0 0
      %659 = vmatpush.bf16.msra.mxu0 0
      %660 = vmatpush.bf16.msra.mxu0 0
      %661 = vmatpush.bf16.msra.mxu0 0
      %662 = vmatpush.bf16.msra.mxu0 0
      %663 = vmatpush.bf16.msra.mxu0 0
      %664 = vmatpush.bf16.msra.mxu0 0
      %665 = vmatpush.bf16.msra.mxu0 %v656
      %666 = vmatmul.bf16.gmra.mxu0 %v608
      %v667 = vpop.f32.mrf.mxu0
      %v668 = vadd.f32 %v528, %v667
      %v669 = vpop.f32.mrf.mxu0
      %v670 = vadd.f32 %v530, %v669
      %671 = vmatmul.bf16.gmra.mxu0 %v611
      %v672 = vpop.f32.mrf.mxu0
      %v673 = vadd.f32 %v533, %v672
      %v674 = vpop.f32.mrf.mxu0
      %v675 = vadd.f32 %v535, %v674
      %676 = vmatmul.bf16.gmra.mxu0 %v614
      %v677 = vpop.f32.mrf.mxu0
      %v678 = vadd.f32 %v538, %v677
      %v679 = vpop.f32.mrf.mxu0
      %v680 = vadd.f32 %v540, %v679
      %681 = vmatmul.bf16.gmra.mxu0 %v617
      %v682 = vpop.f32.mrf.mxu0
      %v683 = vadd.f32 %v543, %v682
      %v684 = vpop.f32.mrf.mxu0
      %v685 = vadd.f32 %v545, %v684
      %686 = vmatmul.bf16.gmra.mxu0 %v620
      %v687 = vpop.f32.mrf.mxu0
      %v688 = vadd.f32 %v548, %v687
      %v689 = vpop.f32.mrf.mxu0
      %v690 = vadd.f32 %v550, %v689
      %691 = vmatmul.bf16.gmra.mxu0 %v623
      %v692 = vpop.f32.mrf.mxu0
      %v693 = vadd.f32 %v553, %v692
      %v694 = vpop.f32.mrf.mxu0
      %v695 = vadd.f32 %v555, %v694
      %696 = vmatmul.bf16.gmra.mxu0 %v626
      %v697 = vpop.f32.mrf.mxu0
      %v698 = vadd.f32 %v558, %v697
      %v699 = vpop.f32.mrf.mxu0
      %v700 = vadd.f32 %v560, %v699
      %701 = vmatmul.bf16.gmra.mxu0 %v629
      %v702 = vpop.f32.mrf.mxu0
      %v703 = vadd.f32 %v563, %v702
      %v704 = vpop.f32.mrf.mxu0
      %v705 = vadd.f32 %v565, %v704
      %706 = vmatmul.bf16.gmra.mxu0 %v632
      %v707 = vpop.f32.mrf.mxu0
      %v708 = vadd.f32 %v568, %v707
      %v709 = vpop.f32.mrf.mxu0
      %v710 = vadd.f32 %v570, %v709
      %711 = vmatmul.bf16.gmra.mxu0 %v635
      %v712 = vpop.f32.mrf.mxu0
      %v713 = vadd.f32 %v573, %v712
      %v714 = vpop.f32.mrf.mxu0
      %v715 = vadd.f32 %v575, %v714
      %716 = vmatmul.bf16.gmra.mxu0 %v638
      %v717 = vpop.f32.mrf.mxu0
      %v718 = vadd.f32 %v578, %v717
      %v719 = vpop.f32.mrf.mxu0
      %v720 = vadd.f32 %v580, %v719
      %721 = vmatmul.bf16.gmra.mxu0 %v641
      %v722 = vpop.f32.mrf.mxu0
      %v723 = vadd.f32 %v583, %v722
      %v724 = vpop.f32.mrf.mxu0
      %v725 = vadd.f32 %v585, %v724
      %726 = vmatmul.bf16.gmra.mxu0 %v644
      %v727 = vpop.f32.mrf.mxu0
      %v728 = vadd.f32 %v588, %v727
      %v729 = vpop.f32.mrf.mxu0
      %v730 = vadd.f32 %v590, %v729
      %731 = vmatmul.bf16.gmra.mxu0 %v647
      %v732 = vpop.f32.mrf.mxu0
      %v733 = vadd.f32 %v593, %v732
      %v734 = vpop.f32.mrf.mxu0
      %v735 = vadd.f32 %v595, %v734
      %736 = vmatmul.bf16.gmra.mxu0 %v650
      %v737 = vpop.f32.mrf.mxu0
      %v738 = vadd.f32 %v598, %v737
      %v739 = vpop.f32.mrf.mxu0
      %v740 = vadd.f32 %v600, %v739
      %741 = vmatmul.bf16.gmra.mxu0 %v653
      %v742 = vpop.f32.mrf.mxu0
      %v743 = vadd.f32 %v603, %v742
      %v744 = vpop.f32.mrf.mxu0
      %v745 = vadd.f32 %v605, %v744
      %746 = vdwg.mxu0
      %v747 = vld [vmem:[%s165] sm:$0xe]
      %v748 = vld [vmem:[%s165 + $0xc] sm:$0xe]
      %v749 = vld [vmem:[%s165 + $0x18] sm:$0xe]
      %v750 = vld [vmem:[%s165 + $0x24] sm:$0xe]
      %v751 = vld [vmem:[%s165 + $0x30] sm:$0xe]
      %v752 = vld [vmem:[%s165 + $0x3c] sm:$0xe]
      %v753 = vld [vmem:[%s165 + $0x48] sm:$0xe]
      %v754 = vld [vmem:[%s165 + $0x54] sm:$0xe]
      %v755 = vld [vmem:[%s165 + $0x60] sm:$0xe]
      %v756 = vld [vmem:[%s165 + $0x6c] sm:$0xe]
      %v757 = vld [vmem:[%s165 + $0x78] sm:$0xe]
      %v758 = vld [vmem:[%s165 + $0x84] sm:$0xe]
      %v759 = vld [vmem:[%s165 + $0x90] sm:$0xe]
      %v760 = vld [vmem:[%s165 + $0x9c] sm:$0xe]
      %v761 = vld [vmem:[%s165 + $0xa8] sm:$0xe]
      %v762 = vld [vmem:[%s165 + $0xb4] sm:$0xe]
      %v763 = vunpack.c.l.bf16 %v747
      %v764 = vunpack.c.l.bf16 %v748
      %v765 = vunpack.c.l.bf16 %v749
      %v766 = vunpack.c.l.bf16 %v750
      %v767 = vunpack.c.l.bf16 %v751
      %v768 = vunpack.c.l.bf16 %v752
      %v769 = vunpack.c.l.bf16 %v753
      %v770 = vunpack.c.l.bf16 %v754
      %v771 = vunpack.c.l.bf16 %v755
      %v772 = vunpack.c.l.bf16 %v756
      %v773 = vunpack.c.l.bf16 %v757
      %v774 = vunpack.c.l.bf16 %v758
      %v775 = vunpack.c.l.bf16 %v759
      %v776 = vunpack.c.l.bf16 %v760
      %v777 = vunpack.c.l.bf16 %v761
      %v778 = vunpack.c.l.bf16 %v762
      %vm795 = vcmask 1045504
      %v796 = vrot.slane %v763, 2
      %v797 = vrot.slane %v206, 2
      %v798 = vsel %vm795, %v796, %v797
      %v799 = vrot.slane %v270, 2
      %v800 = vsel %vm795, %v797, %v799
      %v801 = vrot.slane %v764, 2
      %v802 = vrot.slane %v208, 2
      %v803 = vsel %vm795, %v801, %v802
      %v804 = vrot.slane %v271, 2
      %v805 = vsel %vm795, %v802, %v804
      %v806 = vrot.slane %v765, 2
      %v807 = vrot.slane %v210, 2
      %v808 = vsel %vm795, %v806, %v807
      %v809 = vrot.slane %v272, 2
      %v810 = vsel %vm795, %v807, %v809
      %v811 = vrot.slane %v766, 2
      %v812 = vrot.slane %v212, 2
      %v813 = vsel %vm795, %v811, %v812
      %v814 = vrot.slane %v273, 2
      %v815 = vsel %vm795, %v812, %v814
      %v816 = vrot.slane %v767, 2
      %v817 = vrot.slane %v214, 2
      %v818 = vsel %vm795, %v816, %v817
      %v819 = vrot.slane %v274, 2
      %v820 = vsel %vm795, %v817, %v819
      %v821 = vrot.slane %v768, 2
      %v822 = vrot.slane %v216, 2
      %v823 = vsel %vm795, %v821, %v822
      %v824 = vrot.slane %v275, 2
      %v825 = vsel %vm795, %v822, %v824
      %v826 = vrot.slane %v769, 2
      %v827 = vrot.slane %v218, 2
      %v828 = vsel %vm795, %v826, %v827
      %v829 = vrot.slane %v276, 2
      %v830 = vsel %vm795, %v827, %v829
      %v831 = vrot.slane %v770, 2
      %v832 = vrot.slane %v220, 2
      %v833 = vsel %vm795, %v831, %v832
      %v834 = vrot.slane %v277, 2
      %v835 = vsel %vm795, %v832, %v834
      %v836 = vrot.slane %v771, 2
      %v837 = vrot.slane %v222, 2
      %v838 = vsel %vm795, %v836, %v837
      %v839 = vrot.slane %v278, 2
      %v840 = vsel %vm795, %v837, %v839
      %v841 = vrot.slane %v772, 2
      %v842 = vrot.slane %v224, 2
      %v843 = vsel %vm795, %v841, %v842
      %v844 = vrot.slane %v279, 2
      %v845 = vsel %vm795, %v842, %v844
      %v846 = vrot.slane %v773, 2
      %v847 = vrot.slane %v226, 2
      %v848 = vsel %vm795, %v846, %v847
      %v849 = vrot.slane %v280, 2
      %v850 = vsel %vm795, %v847, %v849
      %v851 = vrot.slane %v774, 2
      %v852 = vrot.slane %v228, 2
      %v853 = vsel %vm795, %v851, %v852
      %v854 = vrot.slane %v281, 2
      %v855 = vsel %vm795, %v852, %v854
      %v856 = vrot.slane %v775, 2
      %v857 = vrot.slane %v230, 2
      %v858 = vsel %vm795, %v856, %v857
      %v859 = vrot.slane %v282, 2
      %v860 = vsel %vm795, %v857, %v859
      %v861 = vrot.slane %v776, 2
      %v862 = vrot.slane %v232, 2
      %v863 = vsel %vm795, %v861, %v862
      %v864 = vrot.slane %v283, 2
      %v865 = vsel %vm795, %v862, %v864
      %v866 = vrot.slane %v777, 2
      %v867 = vrot.slane %v234, 2
      %v868 = vsel %vm795, %v866, %v867
      %v869 = vrot.slane %v284, 2
      %v870 = vsel %vm795, %v867, %v869
      %v871 = vrot.slane %v778, 2
      %v872 = vrot.slane %v236, 2
      %v873 = vsel %vm795, %v871, %v872
      %v874 = vrot.slane %v285, 2
      %v875 = vsel %vm795, %v872, %v874
      %v908 = vpack.c.bf16 %v800, %v798
      %v909 = vpack.c.bf16 %v805, %v803
      %v910 = vpack.c.bf16 %v810, %v808
      %v911 = vpack.c.bf16 %v815, %v813
      %v912 = vpack.c.bf16 %v820, %v818
      %v913 = vpack.c.bf16 %v825, %v823
      %v914 = vpack.c.bf16 %v830, %v828
      %v915 = vpack.c.bf16 %v835, %v833
      %v916 = vpack.c.bf16 %v840, %v838
      %v917 = vpack.c.bf16 %v845, %v843
      %v918 = vpack.c.bf16 %v850, %v848
      %v919 = vpack.c.bf16 %v855, %v853
      %v920 = vpack.c.bf16 %v860, %v858
      %v921 = vpack.c.bf16 %v865, %v863
      %v922 = vpack.c.bf16 %v870, %v868
      %v923 = vpack.c.bf16 %v875, %v873
      %s924 = scalar_lea.vmem %s1, 4
      %v925 = vld [vmem:[%s924] sm:$0x3]
      %v927 = vsel %vm465, %v908, 0
      %v930 = vsel %vm465, %v909, 0
      %v933 = vsel %vm465, %v910, 0
      %v936 = vsel %vm465, %v911, 0
      %v939 = vsel %vm465, %v912, 0
      %v942 = vsel %vm465, %v913, 0
      %v945 = vsel %vm465, %v914, 0
      %v948 = vsel %vm465, %v915, 0
      %v951 = vsel %vm465, %v916, 0
      %v954 = vsel %vm465, %v917, 0
      %v957 = vsel %vm465, %v918, 0
      %v960 = vsel %vm465, %v919, 0
      %v963 = vsel %vm465, %v920, 0
      %v966 = vsel %vm465, %v921, 0
      %v969 = vsel %vm465, %v922, 0
      %v972 = vsel %vm465, %v923, 0
      %v975 = vsel %vm514, %v925, 0
      %977 = vmatpush.bf16.msra.mxu0 0
      %978 = vmatpush.bf16.msra.mxu0 0
      %979 = vmatpush.bf16.msra.mxu0 0
      %980 = vmatpush.bf16.msra.mxu0 0
      %981 = vmatpush.bf16.msra.mxu0 0
      %982 = vmatpush.bf16.msra.mxu0 0
      %983 = vmatpush.bf16.msra.mxu0 0
      %984 = vmatpush.bf16.msra.mxu0 %v975
      %985 = vmatmul.bf16.gmra.mxu0 %v927
      %v986 = vpop.f32.mrf.mxu0
      %v987 = vadd.f32 0.0, %v986
      %v988 = vpop.f32.mrf.mxu0
      %v989 = vadd.f32 0.0, %v988
      %990 = vmatmul.bf16.gmra.mxu0 %v930
      %v991 = vpop.f32.mrf.mxu0
      %v992 = vadd.f32 0.0, %v991
      %v993 = vpop.f32.mrf.mxu0
      %v994 = vadd.f32 0.0, %v993
      %995 = vmatmul.bf16.gmra.mxu0 %v933
      %v996 = vpop.f32.mrf.mxu0
      %v997 = vadd.f32 0.0, %v996
      %v998 = vpop.f32.mrf.mxu0
      %v999 = vadd.f32 0.0, %v998
      %1000 = vmatmul.bf16.gmra.mxu0 %v936
      %v1001 = vpop.f32.mrf.mxu0
      %v1002 = vadd.f32 0.0, %v1001
      %v1003 = vpop.f32.mrf.mxu0
      %v1004 = vadd.f32 0.0, %v1003
      %1005 = vmatmul.bf16.gmra.mxu0 %v939
      %v1006 = vpop.f32.mrf.mxu0
      %v1007 = vadd.f32 0.0, %v1006
      %v1008 = vpop.f32.mrf.mxu0
      %v1009 = vadd.f32 0.0, %v1008
      %1010 = vmatmul.bf16.gmra.mxu0 %v942
      %v1011 = vpop.f32.mrf.mxu0
      %v1012 = vadd.f32 0.0, %v1011
      %v1013 = vpop.f32.mrf.mxu0
      %v1014 = vadd.f32 0.0, %v1013
      %1015 = vmatmul.bf16.gmra.mxu0 %v945
      %v1016 = vpop.f32.mrf.mxu0
      %v1017 = vadd.f32 0.0, %v1016
      %v1018 = vpop.f32.mrf.mxu0
      %v1019 = vadd.f32 0.0, %v1018
      %1020 = vmatmul.bf16.gmra.mxu0 %v948
      %v1021 = vpop.f32.mrf.mxu0
      %v1022 = vadd.f32 0.0, %v1021
      %v1023 = vpop.f32.mrf.mxu0
      %v1024 = vadd.f32 0.0, %v1023
      %1025 = vmatmul.bf16.gmra.mxu0 %v951
      %v1026 = vpop.f32.mrf.mxu0
      %v1027 = vadd.f32 0.0, %v1026
      %v1028 = vpop.f32.mrf.mxu0
      %v1029 = vadd.f32 0.0, %v1028
      %1030 = vmatmul.bf16.gmra.mxu0 %v954
      %v1031 = vpop.f32.mrf.mxu0
      %v1032 = vadd.f32 0.0, %v1031
      %v1033 = vpop.f32.mrf.mxu0
      %v1034 = vadd.f32 0.0, %v1033
      %1035 = vmatmul.bf16.gmra.mxu0 %v957
      %v1036 = vpop.f32.mrf.mxu0
      %v1037 = vadd.f32 0.0, %v1036
      %v1038 = vpop.f32.mrf.mxu0
      %v1039 = vadd.f32 0.0, %v1038
      %1040 = vmatmul.bf16.gmra.mxu0 %v960
      %v1041 = vpop.f32.mrf.mxu0
      %v1042 = vadd.f32 0.0, %v1041
      %v1043 = vpop.f32.mrf.mxu0
      %v1044 = vadd.f32 0.0, %v1043
      %1045 = vmatmul.bf16.gmra.mxu0 %v963
      %v1046 = vpop.f32.mrf.mxu0
      %v1047 = vadd.f32 0.0, %v1046
      %v1048 = vpop.f32.mrf.mxu0
      %v1049 = vadd.f32 0.0, %v1048
      %1050 = vmatmul.bf16.gmra.mxu0 %v966
      %v1051 = vpop.f32.mrf.mxu0
      %v1052 = vadd.f32 0.0, %v1051
      %v1053 = vpop.f32.mrf.mxu0
      %v1054 = vadd.f32 0.0, %v1053
      %1055 = vmatmul.bf16.gmra.mxu0 %v969
      %v1056 = vpop.f32.mrf.mxu0
      %v1057 = vadd.f32 0.0, %v1056
      %v1058 = vpop.f32.mrf.mxu0
      %v1059 = vadd.f32 0.0, %v1058
      %1060 = vmatmul.bf16.gmra.mxu0 %v972
      %v1061 = vpop.f32.mrf.mxu0
      %v1062 = vadd.f32 0.0, %v1061
      %v1063 = vpop.f32.mrf.mxu0
      %v1064 = vadd.f32 0.0, %v1063
      %1065 = vdwg.mxu0
      %v1066 = vadd.f32 %v668, %v987
      %v1067 = vadd.f32 %v670, %v989
      %v1068 = vadd.f32 %v673, %v992
      %v1069 = vadd.f32 %v675, %v994
      %v1070 = vadd.f32 %v678, %v997
      %v1071 = vadd.f32 %v680, %v999
      %v1072 = vadd.f32 %v683, %v1002
      %v1073 = vadd.f32 %v685, %v1004
      %v1074 = vadd.f32 %v688, %v1007
      %v1075 = vadd.f32 %v690, %v1009
      %v1076 = vadd.f32 %v693, %v1012
      %v1077 = vadd.f32 %v695, %v1014
      %v1078 = vadd.f32 %v698, %v1017
      %v1079 = vadd.f32 %v700, %v1019
      %v1080 = vadd.f32 %v703, %v1022
      %v1081 = vadd.f32 %v705, %v1024
      %v1082 = vadd.f32 %v708, %v1027
      %v1083 = vadd.f32 %v710, %v1029
      %v1084 = vadd.f32 %v713, %v1032
      %v1085 = vadd.f32 %v715, %v1034
      %v1086 = vadd.f32 %v718, %v1037
      %v1087 = vadd.f32 %v720, %v1039
      %v1088 = vadd.f32 %v723, %v1042
      %v1089 = vadd.f32 %v725, %v1044
      %v1090 = vadd.f32 %v728, %v1047
      %v1091 = vadd.f32 %v730, %v1049
      %v1092 = vadd.f32 %v733, %v1052
      %v1093 = vadd.f32 %v735, %v1054
      %v1094 = vadd.f32 %v738, %v1057
      %v1095 = vadd.f32 %v740, %v1059
      %v1096 = vadd.f32 %v743, %v1062
      %v1097 = vadd.f32 %v745, %v1064
      %s1098 = scalar_lea.vmem %s165, 12
      %v1099 = vld [vmem:[%s1098] sm:$0xf]
      %v1100 = vld [vmem:[%s1098 + $0x4] sm:$0xf]
      %v1101 = vld [vmem:[%s1098 + $0xc] sm:$0xf]
      %v1102 = vld [vmem:[%s1098 + $0x10] sm:$0xf]
      %v1103 = vld [vmem:[%s1098 + $0x18] sm:$0xf]
      %v1104 = vld [vmem:[%s1098 + $0x1c] sm:$0xf]
      %v1105 = vld [vmem:[%s1098 + $0x24] sm:$0xf]
      %v1106 = vld [vmem:[%s1098 + $0x28] sm:$0xf]
      %v1107 = vld [vmem:[%s1098 + $0x30] sm:$0xf]
      %v1108 = vld [vmem:[%s1098 + $0x34] sm:$0xf]
      %v1109 = vld [vmem:[%s1098 + $0x3c] sm:$0xf]
      %v1110 = vld [vmem:[%s1098 + $0x40] sm:$0xf]
      %v1111 = vld [vmem:[%s1098 + $0x48] sm:$0xf]
      %v1112 = vld [vmem:[%s1098 + $0x4c] sm:$0xf]
      %v1113 = vld [vmem:[%s1098 + $0x54] sm:$0xf]
      %v1114 = vld [vmem:[%s1098 + $0x58] sm:$0xf]
      %v1115 = vld [vmem:[%s1098 + $0x60] sm:$0xf]
      %v1116 = vld [vmem:[%s1098 + $0x64] sm:$0xf]
      %v1117 = vld [vmem:[%s1098 + $0x6c] sm:$0xf]
      %v1118 = vld [vmem:[%s1098 + $0x70] sm:$0xf]
      %v1119 = vld [vmem:[%s1098 + $0x78] sm:$0xf]
      %v1120 = vld [vmem:[%s1098 + $0x7c] sm:$0xf]
      %v1121 = vld [vmem:[%s1098 + $0x84] sm:$0xf]
      %v1122 = vld [vmem:[%s1098 + $0x88] sm:$0xf]
      %v1123 = vld [vmem:[%s1098 + $0x90] sm:$0xf]
      %v1124 = vld [vmem:[%s1098 + $0x94] sm:$0xf]
      %v1125 = vld [vmem:[%s1098 + $0x9c] sm:$0xf]
      %v1126 = vld [vmem:[%s1098 + $0xa0] sm:$0xf]
      %v1127 = vld [vmem:[%s1098 + $0xa8] sm:$0xf]
      %v1128 = vld [vmem:[%s1098 + $0xac] sm:$0xf]
      %v1129 = vld [vmem:[%s1098 + $0xb4] sm:$0xf]
      %v1130 = vld [vmem:[%s1098 + $0xb8] sm:$0xf]
      %v1131 = vunpack.c.l.bf16 %v1099
      %v1132 = vunpack.c.l.bf16 %v1100
      %v1133 = vunpack.c.l.bf16 %v1101
      %v1134 = vunpack.c.l.bf16 %v1102
      %v1135 = vunpack.c.l.bf16 %v1103
      %v1136 = vunpack.c.l.bf16 %v1104
      %v1137 = vunpack.c.l.bf16 %v1105
      %v1138 = vunpack.c.l.bf16 %v1106
      %v1139 = vunpack.c.l.bf16 %v1107
      %v1140 = vunpack.c.l.bf16 %v1108
      %v1141 = vunpack.c.l.bf16 %v1109
      %v1142 = vunpack.c.l.bf16 %v1110
      %v1143 = vunpack.c.l.bf16 %v1111
      %v1144 = vunpack.c.l.bf16 %v1112
      %v1145 = vunpack.c.l.bf16 %v1113
      %v1146 = vunpack.c.l.bf16 %v1114
      %v1147 = vunpack.c.l.bf16 %v1115
      %v1148 = vunpack.c.l.bf16 %v1116
      %v1149 = vunpack.c.l.bf16 %v1117
      %v1150 = vunpack.c.l.bf16 %v1118
      %v1151 = vunpack.c.l.bf16 %v1119
      %v1152 = vunpack.c.l.bf16 %v1120
      %v1153 = vunpack.c.l.bf16 %v1121
      %v1154 = vunpack.c.l.bf16 %v1122
      %v1155 = vunpack.c.l.bf16 %v1123
      %v1156 = vunpack.c.l.bf16 %v1124
      %v1157 = vunpack.c.l.bf16 %v1125
      %v1158 = vunpack.c.l.bf16 %v1126
      %v1159 = vunpack.c.l.bf16 %v1127
      %v1160 = vunpack.c.l.bf16 %v1128
      %v1161 = vunpack.c.l.bf16 %v1129
      %v1162 = vunpack.c.l.bf16 %v1130
      %v1163 = vpack.c.bf16 %v1132, %v1131
      %v1164 = vpack.c.bf16 %v1134, %v1133
      %v1165 = vpack.c.bf16 %v1136, %v1135
      %v1166 = vpack.c.bf16 %v1138, %v1137
      %v1167 = vpack.c.bf16 %v1140, %v1139
      %v1168 = vpack.c.bf16 %v1142, %v1141
      %v1169 = vpack.c.bf16 %v1144, %v1143
      %v1170 = vpack.c.bf16 %v1146, %v1145
      %v1171 = vpack.c.bf16 %v1148, %v1147
      %v1172 = vpack.c.bf16 %v1150, %v1149
      %v1173 = vpack.c.bf16 %v1152, %v1151
      %v1174 = vpack.c.bf16 %v1154, %v1153
      %v1175 = vpack.c.bf16 %v1156, %v1155
      %v1176 = vpack.c.bf16 %v1158, %v1157
      %v1177 = vpack.c.bf16 %v1160, %v1159
      %v1178 = vpack.c.bf16 %v1162, %v1161
      %s1179 = scalar_lea.vmem %s1, 6
      %v1180 = vld [vmem:[%s1179] sm:$0x3]
      %v1182 = vsel %vm465, %v1163, 0
      %v1185 = vsel %vm465, %v1164, 0
      %v1188 = vsel %vm465, %v1165, 0
      %v1191 = vsel %vm465, %v1166, 0
      %v1194 = vsel %vm465, %v1167, 0
      %v1197 = vsel %vm465, %v1168, 0
      %v1200 = vsel %vm465, %v1169, 0
      %v1203 = vsel %vm465, %v1170, 0
      %v1206 = vsel %vm465, %v1171, 0
      %v1209 = vsel %vm465, %v1172, 0
      %v1212 = vsel %vm465, %v1173, 0
      %v1215 = vsel %vm465, %v1174, 0
      %v1218 = vsel %vm465, %v1175, 0
      %v1221 = vsel %vm465, %v1176, 0
      %v1224 = vsel %vm465, %v1177, 0
      %v1227 = vsel %vm465, %v1178, 0
      %v1230 = vsel %vm514, %v1180, 0
      %1232 = vmatpush.bf16.msra.mxu0 0
      %1233 = vmatpush.bf16.msra.mxu0 0
      %1234 = vmatpush.bf16.msra.mxu0 0
      %1235 = vmatpush.bf16.msra.mxu0 0
      %1236 = vmatpush.bf16.msra.mxu0 0
      %1237 = vmatpush.bf16.msra.mxu0 0
      %1238 = vmatpush.bf16.msra.mxu0 0
      %1239 = vmatpush.bf16.msra.mxu0 %v1230
      %1240 = vmatmul.bf16.gmra.mxu0 %v1182
      %v1241 = vpop.f32.mrf.mxu0
      %v1242 = vadd.f32 0.0, %v1241
      %v1243 = vpop.f32.mrf.mxu0
      %v1244 = vadd.f32 0.0, %v1243
      %1245 = vmatmul.bf16.gmra.mxu0 %v1185
      %v1246 = vpop.f32.mrf.mxu0
      %v1247 = vadd.f32 0.0, %v1246
      %v1248 = vpop.f32.mrf.mxu0
      %v1249 = vadd.f32 0.0, %v1248
      %1250 = vmatmul.bf16.gmra.mxu0 %v1188
      %v1251 = vpop.f32.mrf.mxu0
      %v1252 = vadd.f32 0.0, %v1251
      %v1253 = vpop.f32.mrf.mxu0
      %v1254 = vadd.f32 0.0, %v1253
      %1255 = vmatmul.bf16.gmra.mxu0 %v1191
      %v1256 = vpop.f32.mrf.mxu0
      %v1257 = vadd.f32 0.0, %v1256
      %v1258 = vpop.f32.mrf.mxu0
      %v1259 = vadd.f32 0.0, %v1258
      %1260 = vmatmul.bf16.gmra.mxu0 %v1194
      %v1261 = vpop.f32.mrf.mxu0
      %v1262 = vadd.f32 0.0, %v1261
      %v1263 = vpop.f32.mrf.mxu0
      %v1264 = vadd.f32 0.0, %v1263
      %1265 = vmatmul.bf16.gmra.mxu0 %v1197
      %v1266 = vpop.f32.mrf.mxu0
      %v1267 = vadd.f32 0.0, %v1266
      %v1268 = vpop.f32.mrf.mxu0
      %v1269 = vadd.f32 0.0, %v1268
      %1270 = vmatmul.bf16.gmra.mxu0 %v1200
      %v1271 = vpop.f32.mrf.mxu0
      %v1272 = vadd.f32 0.0, %v1271
      %v1273 = vpop.f32.mrf.mxu0
      %v1274 = vadd.f32 0.0, %v1273
      %1275 = vmatmul.bf16.gmra.mxu0 %v1203
      %v1276 = vpop.f32.mrf.mxu0
      %v1277 = vadd.f32 0.0, %v1276
      %v1278 = vpop.f32.mrf.mxu0
      %v1279 = vadd.f32 0.0, %v1278
      %1280 = vmatmul.bf16.gmra.mxu0 %v1206
      %v1281 = vpop.f32.mrf.mxu0
      %v1282 = vadd.f32 0.0, %v1281
      %v1283 = vpop.f32.mrf.mxu0
      %v1284 = vadd.f32 0.0, %v1283
      %1285 = vmatmul.bf16.gmra.mxu0 %v1209
      %v1286 = vpop.f32.mrf.mxu0
      %v1287 = vadd.f32 0.0, %v1286
      %v1288 = vpop.f32.mrf.mxu0
      %v1289 = vadd.f32 0.0, %v1288
      %1290 = vmatmul.bf16.gmra.mxu0 %v1212
      %v1291 = vpop.f32.mrf.mxu0
      %v1292 = vadd.f32 0.0, %v1291
      %v1293 = vpop.f32.mrf.mxu0
      %v1294 = vadd.f32 0.0, %v1293
      %1295 = vmatmul.bf16.gmra.mxu0 %v1215
      %v1296 = vpop.f32.mrf.mxu0
      %v1297 = vadd.f32 0.0, %v1296
      %v1298 = vpop.f32.mrf.mxu0
      %v1299 = vadd.f32 0.0, %v1298
      %1300 = vmatmul.bf16.gmra.mxu0 %v1218
      %v1301 = vpop.f32.mrf.mxu0
      %v1302 = vadd.f32 0.0, %v1301
      %v1303 = vpop.f32.mrf.mxu0
      %v1304 = vadd.f32 0.0, %v1303
      %1305 = vmatmul.bf16.gmra.mxu0 %v1221
      %v1306 = vpop.f32.mrf.mxu0
      %v1307 = vadd.f32 0.0, %v1306
      %v1308 = vpop.f32.mrf.mxu0
      %v1309 = vadd.f32 0.0, %v1308
      %1310 = vmatmul.bf16.gmra.mxu0 %v1224
      %v1311 = vpop.f32.mrf.mxu0
      %v1312 = vadd.f32 0.0, %v1311
      %v1313 = vpop.f32.mrf.mxu0
      %v1314 = vadd.f32 0.0, %v1313
      %1315 = vmatmul.bf16.gmra.mxu0 %v1227
      %v1316 = vpop.f32.mrf.mxu0
      %v1317 = vadd.f32 0.0, %v1316
      %v1318 = vpop.f32.mrf.mxu0
      %v1319 = vadd.f32 0.0, %v1318
      %1320 = vdwg.mxu0
      %v1321 = vadd.f32 %v1066, %v1242
      %v1322 = vadd.f32 %v1067, %v1244
      %v1323 = vadd.f32 %v1068, %v1247
      %v1324 = vadd.f32 %v1069, %v1249
      %v1325 = vadd.f32 %v1070, %v1252
      %v1326 = vadd.f32 %v1071, %v1254
      %v1327 = vadd.f32 %v1072, %v1257
      %v1328 = vadd.f32 %v1073, %v1259
      %v1329 = vadd.f32 %v1074, %v1262
      %v1330 = vadd.f32 %v1075, %v1264
      %v1331 = vadd.f32 %v1076, %v1267
      %v1332 = vadd.f32 %v1077, %v1269
      %v1333 = vadd.f32 %v1078, %v1272
      %v1334 = vadd.f32 %v1079, %v1274
      %v1335 = vadd.f32 %v1080, %v1277
      %v1336 = vadd.f32 %v1081, %v1279
      %v1337 = vadd.f32 %v1082, %v1282
      %v1338 = vadd.f32 %v1083, %v1284
      %v1339 = vadd.f32 %v1084, %v1287
      %v1340 = vadd.f32 %v1085, %v1289
      %v1341 = vadd.f32 %v1086, %v1292
      %v1342 = vadd.f32 %v1087, %v1294
      %v1343 = vadd.f32 %v1088, %v1297
      %v1344 = vadd.f32 %v1089, %v1299
      %v1345 = vadd.f32 %v1090, %v1302
      %v1346 = vadd.f32 %v1091, %v1304
      %v1347 = vadd.f32 %v1092, %v1307
      %v1348 = vadd.f32 %v1093, %v1309
      %v1349 = vadd.f32 %v1094, %v1312
      %v1350 = vadd.f32 %v1095, %v1314
      %v1351 = vadd.f32 %v1096, %v1317
      %v1352 = vadd.f32 %v1097, %v1319
      %v1353 = vld [vmem:[%s1098] sm:$0xf]
      %v1354 = vld [vmem:[%s1098 + $0x4] sm:$0xf]
      %v1355 = vld [vmem:[%s1098 + $0x8] sm:$0x1]
      %v1356 = vld [vmem:[%s1098 + $0xc] sm:$0xf]
      %v1357 = vld [vmem:[%s1098 + $0x10] sm:$0xf]
      %v1358 = vld [vmem:[%s1098 + $0x14] sm:$0x1]
      %v1359 = vld [vmem:[%s1098 + $0x18] sm:$0xf]
      %v1360 = vld [vmem:[%s1098 + $0x1c] sm:$0xf]
      %v1361 = vld [vmem:[%s1098 + $0x20] sm:$0x1]
      %v1362 = vld [vmem:[%s1098 + $0x24] sm:$0xf]
      %v1363 = vld [vmem:[%s1098 + $0x28] sm:$0xf]
      %v1364 = vld [vmem:[%s1098 + $0x2c] sm:$0x1]
      %v1365 = vld [vmem:[%s1098 + $0x30] sm:$0xf]
      %v1366 = vld [vmem:[%s1098 + $0x34] sm:$0xf]
      %v1367 = vld [vmem:[%s1098 + $0x38] sm:$0x1]
      %v1368 = vld [vmem:[%s1098 + $0x3c] sm:$0xf]
      %v1369 = vld [vmem:[%s1098 + $0x40] sm:$0xf]
      %v1370 = vld [vmem:[%s1098 + $0x44] sm:$0x1]
      %v1371 = vld [vmem:[%s1098 + $0x48] sm:$0xf]
      %v1372 = vld [vmem:[%s1098 + $0x4c] sm:$0xf]
      %v1373 = vld [vmem:[%s1098 + $0x50] sm:$0x1]
      %v1374 = vld [vmem:[%s1098 + $0x54] sm:$0xf]
      %v1375 = vld [vmem:[%s1098 + $0x58] sm:$0xf]
      %v1376 = vld [vmem:[%s1098 + $0x5c] sm:$0x1]
      %v1377 = vld [vmem:[%s1098 + $0x60] sm:$0xf]
      %v1378 = vld [vmem:[%s1098 + $0x64] sm:$0xf]
      %v1379 = vld [vmem:[%s1098 + $0x68] sm:$0x1]
      %v1380 = vld [vmem:[%s1098 + $0x6c] sm:$0xf]
      %v1381 = vld [vmem:[%s1098 + $0x70] sm:$0xf]
      %v1382 = vld [vmem:[%s1098 + $0x74] sm:$0x1]
      %v1383 = vld [vmem:[%s1098 + $0x78] sm:$0xf]
      %v1384 = vld [vmem:[%s1098 + $0x7c] sm:$0xf]
      %v1385 = vld [vmem:[%s1098 + $0x80] sm:$0x1]
      %v1386 = vld [vmem:[%s1098 + $0x84] sm:$0xf]
      %v1387 = vld [vmem:[%s1098 + $0x88] sm:$0xf]
      %v1388 = vld [vmem:[%s1098 + $0x8c] sm:$0x1]
      %v1389 = vld [vmem:[%s1098 + $0x90] sm:$0xf]
      %v1390 = vld [vmem:[%s1098 + $0x94] sm:$0xf]
      %v1391 = vld [vmem:[%s1098 + $0x98] sm:$0x1]
      %v1392 = vld [vmem:[%s1098 + $0x9c] sm:$0xf]
      %v1393 = vld [vmem:[%s1098 + $0xa0] sm:$0xf]
      %v1394 = vld [vmem:[%s1098 + $0xa4] sm:$0x1]
      %v1395 = vld [vmem:[%s1098 + $0xa8] sm:$0xf]
      %v1396 = vld [vmem:[%s1098 + $0xac] sm:$0xf]
      %v1397 = vld [vmem:[%s1098 + $0xb0] sm:$0x1]
      %v1398 = vld [vmem:[%s1098 + $0xb4] sm:$0xf]
      %v1399 = vld [vmem:[%s1098 + $0xb8] sm:$0xf]
      %v1400 = vld [vmem:[%s1098 + $0xbc] sm:$0x1]
      %v1401 = vunpack.c.l.bf16 %v1353
      %v1402 = vunpack.c.l.bf16 %v1354
      %v1403 = vunpack.c.l.bf16 %v1355
      %v1404 = vunpack.c.l.bf16 %v1356
      %v1405 = vunpack.c.l.bf16 %v1357
      %v1406 = vunpack.c.l.bf16 %v1358
      %v1407 = vunpack.c.l.bf16 %v1359
      %v1408 = vunpack.c.l.bf16 %v1360
      %v1409 = vunpack.c.l.bf16 %v1361
      %v1410 = vunpack.c.l.bf16 %v1362
      %v1411 = vunpack.c.l.bf16 %v1363
      %v1412 = vunpack.c.l.bf16 %v1364
      %v1413 = vunpack.c.l.bf16 %v1365
      %v1414 = vunpack.c.l.bf16 %v1366
      %v1415 = vunpack.c.l.bf16 %v1367
      %v1416 = vunpack.c.l.bf16 %v1368
      %v1417 = vunpack.c.l.bf16 %v1369
      %v1418 = vunpack.c.l.bf16 %v1370
      %v1419 = vunpack.c.l.bf16 %v1371
      %v1420 = vunpack.c.l.bf16 %v1372
      %v1421 = vunpack.c.l.bf16 %v1373
      %v1422 = vunpack.c.l.bf16 %v1374
      %v1423 = vunpack.c.l.bf16 %v1375
      %v1424 = vunpack.c.l.bf16 %v1376
      %v1425 = vunpack.c.l.bf16 %v1377
      %v1426 = vunpack.c.l.bf16 %v1378
      %v1427 = vunpack.c.l.bf16 %v1379
      %v1428 = vunpack.c.l.bf16 %v1380
      %v1429 = vunpack.c.l.bf16 %v1381
      %v1430 = vunpack.c.l.bf16 %v1382
      %v1431 = vunpack.c.l.bf16 %v1383
      %v1432 = vunpack.c.l.bf16 %v1384
      %v1433 = vunpack.c.l.bf16 %v1385
      %v1434 = vunpack.c.l.bf16 %v1386
      %v1435 = vunpack.c.l.bf16 %v1387
      %v1436 = vunpack.c.l.bf16 %v1388
      %v1437 = vunpack.c.l.bf16 %v1389
      %v1438 = vunpack.c.l.bf16 %v1390
      %v1439 = vunpack.c.l.bf16 %v1391
      %v1440 = vunpack.c.l.bf16 %v1392
      %v1441 = vunpack.c.l.bf16 %v1393
      %v1442 = vunpack.c.l.bf16 %v1394
      %v1443 = vunpack.c.l.bf16 %v1395
      %v1444 = vunpack.c.l.bf16 %v1396
      %v1445 = vunpack.c.l.bf16 %v1397
      %v1446 = vunpack.c.l.bf16 %v1398
      %v1447 = vunpack.c.l.bf16 %v1399
      %v1448 = vunpack.c.l.bf16 %v1400
      %v1497 = vrot.slane %v1401, 1
      %v1498 = vrot.slane %v1402, 1
      %v1499 = vsel %vm334, %v1497, %v1498
      %v1500 = vrot.slane %v1403, 1
      %v1501 = vsel %vm334, %v1498, %v1500
      %v1502 = vrot.slane %v1404, 1
      %v1503 = vrot.slane %v1405, 1
      %v1504 = vsel %vm334, %v1502, %v1503
      %v1505 = vrot.slane %v1406, 1
      %v1506 = vsel %vm334, %v1503, %v1505
      %v1507 = vrot.slane %v1407, 1
      %v1508 = vrot.slane %v1408, 1
      %v1509 = vsel %vm334, %v1507, %v1508
      %v1510 = vrot.slane %v1409, 1
      %v1511 = vsel %vm334, %v1508, %v1510
      %v1512 = vrot.slane %v1410, 1
      %v1513 = vrot.slane %v1411, 1
      %v1514 = vsel %vm334, %v1512, %v1513
      %v1515 = vrot.slane %v1412, 1
      %v1516 = vsel %vm334, %v1513, %v1515
      %v1517 = vrot.slane %v1413, 1
      %v1518 = vrot.slane %v1414, 1
      %v1519 = vsel %vm334, %v1517, %v1518
      %v1520 = vrot.slane %v1415, 1
      %v1521 = vsel %vm334, %v1518, %v1520
      %v1522 = vrot.slane %v1416, 1
      %v1523 = vrot.slane %v1417, 1
      %v1524 = vsel %vm334, %v1522, %v1523
      %v1525 = vrot.slane %v1418, 1
      %v1526 = vsel %vm334, %v1523, %v1525
      %v1527 = vrot.slane %v1419, 1
      %v1528 = vrot.slane %v1420, 1
      %v1529 = vsel %vm334, %v1527, %v1528
      %v1530 = vrot.slane %v1421, 1
      %v1531 = vsel %vm334, %v1528, %v1530
      %v1532 = vrot.slane %v1422, 1
      %v1533 = vrot.slane %v1423, 1
      %v1534 = vsel %vm334, %v1532, %v1533
      %v1535 = vrot.slane %v1424, 1
      %v1536 = vsel %vm334, %v1533, %v1535
      %v1537 = vrot.slane %v1425, 1
      %v1538 = vrot.slane %v1426, 1
      %v1539 = vsel %vm334, %v1537, %v1538
      %v1540 = vrot.slane %v1427, 1
      %v1541 = vsel %vm334, %v1538, %v1540
      %v1542 = vrot.slane %v1428, 1
      %v1543 = vrot.slane %v1429, 1
      %v1544 = vsel %vm334, %v1542, %v1543
      %v1545 = vrot.slane %v1430, 1
      %v1546 = vsel %vm334, %v1543, %v1545
      %v1547 = vrot.slane %v1431, 1
      %v1548 = vrot.slane %v1432, 1
      %v1549 = vsel %vm334, %v1547, %v1548
      %v1550 = vrot.slane %v1433, 1
      %v1551 = vsel %vm334, %v1548, %v1550
      %v1552 = vrot.slane %v1434, 1
      %v1553 = vrot.slane %v1435, 1
      %v1554 = vsel %vm334, %v1552, %v1553
      %v1555 = vrot.slane %v1436, 1
      %v1556 = vsel %vm334, %v1553, %v1555
      %v1557 = vrot.slane %v1437, 1
      %v1558 = vrot.slane %v1438, 1
      %v1559 = vsel %vm334, %v1557, %v1558
      %v1560 = vrot.slane %v1439, 1
      %v1561 = vsel %vm334, %v1558, %v1560
      %v1562 = vrot.slane %v1440, 1
      %v1563 = vrot.slane %v1441, 1
      %v1564 = vsel %vm334, %v1562, %v1563
      %v1565 = vrot.slane %v1442, 1
      %v1566 = vsel %vm334, %v1563, %v1565
      %v1567 = vrot.slane %v1443, 1
      %v1568 = vrot.slane %v1444, 1
      %v1569 = vsel %vm334, %v1567, %v1568
      %v1570 = vrot.slane %v1445, 1
      %v1571 = vsel %vm334, %v1568, %v1570
      %v1572 = vrot.slane %v1446, 1
      %v1573 = vrot.slane %v1447, 1
      %v1574 = vsel %vm334, %v1572, %v1573
      %v1575 = vrot.slane %v1448, 1
      %v1576 = vsel %vm334, %v1573, %v1575
      %v1609 = vpack.c.bf16 %v1501, %v1499
      %v1610 = vpack.c.bf16 %v1506, %v1504
      %v1611 = vpack.c.bf16 %v1511, %v1509
      %v1612 = vpack.c.bf16 %v1516, %v1514
      %v1613 = vpack.c.bf16 %v1521, %v1519
      %v1614 = vpack.c.bf16 %v1526, %v1524
      %v1615 = vpack.c.bf16 %v1531, %v1529
      %v1616 = vpack.c.bf16 %v1536, %v1534
      %v1617 = vpack.c.bf16 %v1541, %v1539
      %v1618 = vpack.c.bf16 %v1546, %v1544
      %v1619 = vpack.c.bf16 %v1551, %v1549
      %v1620 = vpack.c.bf16 %v1556, %v1554
      %v1621 = vpack.c.bf16 %v1561, %v1559
      %v1622 = vpack.c.bf16 %v1566, %v1564
      %v1623 = vpack.c.bf16 %v1571, %v1569
      %v1624 = vpack.c.bf16 %v1576, %v1574
      %s1625 = scalar_lea.vmem %s1, 8
      %v1626 = vld [vmem:[%s1625] sm:$0x3]
      %v1628 = vsel %vm465, %v1609, 0
      %v1631 = vsel %vm465, %v1610, 0
      %v1634 = vsel %vm465, %v1611, 0
      %v1637 = vsel %vm465, %v1612, 0
      %v1640 = vsel %vm465, %v1613, 0
      %v1643 = vsel %vm465, %v1614, 0
      %v1646 = vsel %vm465, %v1615, 0
      %v1649 = vsel %vm465, %v1616, 0
      %v1652 = vsel %vm465, %v1617, 0
      %v1655 = vsel %vm465, %v1618, 0
      %v1658 = vsel %vm465, %v1619, 0
      %v1661 = vsel %vm465, %v1620, 0
      %v1664 = vsel %vm465, %v1621, 0
      %v1667 = vsel %vm465, %v1622, 0
      %v1670 = vsel %vm465, %v1623, 0
      %v1673 = vsel %vm465, %v1624, 0
      %v1676 = vsel %vm514, %v1626, 0
      %1678 = vmatpush.bf16.msra.mxu0 0
      %1679 = vmatpush.bf16.msra.mxu0 0
      %1680 = vmatpush.bf16.msra.mxu0 0
      %1681 = vmatpush.bf16.msra.mxu0 0
      %1682 = vmatpush.bf16.msra.mxu0 0
      %1683 = vmatpush.bf16.msra.mxu0 0
      %1684 = vmatpush.bf16.msra.mxu0 0
      %1685 = vmatpush.bf16.msra.mxu0 %v1676
      %1686 = vmatmul.bf16.gmra.mxu0 %v1628
      %v1687 = vpop.f32.mrf.mxu0
      %v1688 = vadd.f32 0.0, %v1687
      %v1689 = vpop.f32.mrf.mxu0
      %v1690 = vadd.f32 0.0, %v1689
      %1691 = vmatmul.bf16.gmra.mxu0 %v1631
      %v1692 = vpop.f32.mrf.mxu0
      %v1693 = vadd.f32 0.0, %v1692
      %v1694 = vpop.f32.mrf.mxu0
      %v1695 = vadd.f32 0.0, %v1694
      %1696 = vmatmul.bf16.gmra.mxu0 %v1634
      %v1697 = vpop.f32.mrf.mxu0
      %v1698 = vadd.f32 0.0, %v1697
      %v1699 = vpop.f32.mrf.mxu0
      %v1700 = vadd.f32 0.0, %v1699
      %1701 = vmatmul.bf16.gmra.mxu0 %v1637
      %v1702 = vpop.f32.mrf.mxu0
      %v1703 = vadd.f32 0.0, %v1702
      %v1704 = vpop.f32.mrf.mxu0
      %v1705 = vadd.f32 0.0, %v1704
      %1706 = vmatmul.bf16.gmra.mxu0 %v1640
      %v1707 = vpop.f32.mrf.mxu0
      %v1708 = vadd.f32 0.0, %v1707
      %v1709 = vpop.f32.mrf.mxu0
      %v1710 = vadd.f32 0.0, %v1709
      %1711 = vmatmul.bf16.gmra.mxu0 %v1643
      %v1712 = vpop.f32.mrf.mxu0
      %v1713 = vadd.f32 0.0, %v1712
      %v1714 = vpop.f32.mrf.mxu0
      %v1715 = vadd.f32 0.0, %v1714
      %1716 = vmatmul.bf16.gmra.mxu0 %v1646
      %v1717 = vpop.f32.mrf.mxu0
      %v1718 = vadd.f32 0.0, %v1717
      %v1719 = vpop.f32.mrf.mxu0
      %v1720 = vadd.f32 0.0, %v1719
      %1721 = vmatmul.bf16.gmra.mxu0 %v1649
      %v1722 = vpop.f32.mrf.mxu0
      %v1723 = vadd.f32 0.0, %v1722
      %v1724 = vpop.f32.mrf.mxu0
      %v1725 = vadd.f32 0.0, %v1724
      %1726 = vmatmul.bf16.gmra.mxu0 %v1652
      %v1727 = vpop.f32.mrf.mxu0
      %v1728 = vadd.f32 0.0, %v1727
      %v1729 = vpop.f32.mrf.mxu0
      %v1730 = vadd.f32 0.0, %v1729
      %1731 = vmatmul.bf16.gmra.mxu0 %v1655
      %v1732 = vpop.f32.mrf.mxu0
      %v1733 = vadd.f32 0.0, %v1732
      %v1734 = vpop.f32.mrf.mxu0
      %v1735 = vadd.f32 0.0, %v1734
      %1736 = vmatmul.bf16.gmra.mxu0 %v1658
      %v1737 = vpop.f32.mrf.mxu0
      %v1738 = vadd.f32 0.0, %v1737
      %v1739 = vpop.f32.mrf.mxu0
      %v1740 = vadd.f32 0.0, %v1739
      %1741 = vmatmul.bf16.gmra.mxu0 %v1661
      %v1742 = vpop.f32.mrf.mxu0
      %v1743 = vadd.f32 0.0, %v1742
      %v1744 = vpop.f32.mrf.mxu0
      %v1745 = vadd.f32 0.0, %v1744
      %1746 = vmatmul.bf16.gmra.mxu0 %v1664
      %v1747 = vpop.f32.mrf.mxu0
      %v1748 = vadd.f32 0.0, %v1747
      %v1749 = vpop.f32.mrf.mxu0
      %v1750 = vadd.f32 0.0, %v1749
      %1751 = vmatmul.bf16.gmra.mxu0 %v1667
      %v1752 = vpop.f32.mrf.mxu0
      %v1753 = vadd.f32 0.0, %v1752
      %v1754 = vpop.f32.mrf.mxu0
      %v1755 = vadd.f32 0.0, %v1754
      %1756 = vmatmul.bf16.gmra.mxu0 %v1670
      %v1757 = vpop.f32.mrf.mxu0
      %v1758 = vadd.f32 0.0, %v1757
      %v1759 = vpop.f32.mrf.mxu0
      %v1760 = vadd.f32 0.0, %v1759
      %1761 = vmatmul.bf16.gmra.mxu0 %v1673
      %v1762 = vpop.f32.mrf.mxu0
      %v1763 = vadd.f32 0.0, %v1762
      %v1764 = vpop.f32.mrf.mxu0
      %v1765 = vadd.f32 0.0, %v1764
      %1766 = vdwg.mxu0
      %v1767 = vadd.f32 %v1321, %v1688
      %v1768 = vadd.f32 %v1322, %v1690
      %v1769 = vadd.f32 %v1323, %v1693
      %v1770 = vadd.f32 %v1324, %v1695
      %v1771 = vadd.f32 %v1325, %v1698
      %v1772 = vadd.f32 %v1326, %v1700
      %v1773 = vadd.f32 %v1327, %v1703
      %v1774 = vadd.f32 %v1328, %v1705
      %v1775 = vadd.f32 %v1329, %v1708
      %v1776 = vadd.f32 %v1330, %v1710
      %v1777 = vadd.f32 %v1331, %v1713
      %v1778 = vadd.f32 %v1332, %v1715
      %v1779 = vadd.f32 %v1333, %v1718
      %v1780 = vadd.f32 %v1334, %v1720
      %v1781 = vadd.f32 %v1335, %v1723
      %v1782 = vadd.f32 %v1336, %v1725
      %v1783 = vadd.f32 %v1337, %v1728
      %v1784 = vadd.f32 %v1338, %v1730
      %v1785 = vadd.f32 %v1339, %v1733
      %v1786 = vadd.f32 %v1340, %v1735
      %v1787 = vadd.f32 %v1341, %v1738
      %v1788 = vadd.f32 %v1342, %v1740
      %v1789 = vadd.f32 %v1343, %v1743
      %v1790 = vadd.f32 %v1344, %v1745
      %v1791 = vadd.f32 %v1345, %v1748
      %v1792 = vadd.f32 %v1346, %v1750
      %v1793 = vadd.f32 %v1347, %v1753
      %v1794 = vadd.f32 %v1348, %v1755
      %v1795 = vadd.f32 %v1349, %v1758
      %v1796 = vadd.f32 %v1350, %v1760
      %v1797 = vadd.f32 %v1351, %v1763
      %v1798 = vadd.f32 %v1352, %v1765
      %v1799 = vld [vmem:[%s1098] sm:$0xe]
      %v1800 = vld [vmem:[%s1098 + $0xc] sm:$0xe]
      %v1801 = vld [vmem:[%s1098 + $0x18] sm:$0xe]
      %v1802 = vld [vmem:[%s1098 + $0x24] sm:$0xe]
      %v1803 = vld [vmem:[%s1098 + $0x30] sm:$0xe]
      %v1804 = vld [vmem:[%s1098 + $0x3c] sm:$0xe]
      %v1805 = vld [vmem:[%s1098 + $0x48] sm:$0xe]
      %v1806 = vld [vmem:[%s1098 + $0x54] sm:$0xe]
      %v1807 = vld [vmem:[%s1098 + $0x60] sm:$0xe]
      %v1808 = vld [vmem:[%s1098 + $0x6c] sm:$0xe]
      %v1809 = vld [vmem:[%s1098 + $0x78] sm:$0xe]
      %v1810 = vld [vmem:[%s1098 + $0x84] sm:$0xe]
      %v1811 = vld [vmem:[%s1098 + $0x90] sm:$0xe]
      %v1812 = vld [vmem:[%s1098 + $0x9c] sm:$0xe]
      %v1813 = vld [vmem:[%s1098 + $0xa8] sm:$0xe]
      %v1814 = vld [vmem:[%s1098 + $0xb4] sm:$0xe]
      %v1815 = vunpack.c.l.bf16 %v1799
      %v1816 = vunpack.c.l.bf16 %v1800
      %v1817 = vunpack.c.l.bf16 %v1801
      %v1818 = vunpack.c.l.bf16 %v1802
      %v1819 = vunpack.c.l.bf16 %v1803
      %v1820 = vunpack.c.l.bf16 %v1804
      %v1821 = vunpack.c.l.bf16 %v1805
      %v1822 = vunpack.c.l.bf16 %v1806
      %v1823 = vunpack.c.l.bf16 %v1807
      %v1824 = vunpack.c.l.bf16 %v1808
      %v1825 = vunpack.c.l.bf16 %v1809
      %v1826 = vunpack.c.l.bf16 %v1810
      %v1827 = vunpack.c.l.bf16 %v1811
      %v1828 = vunpack.c.l.bf16 %v1812
      %v1829 = vunpack.c.l.bf16 %v1813
      %v1830 = vunpack.c.l.bf16 %v1814
      %v1847 = vrot.slane %v1815, 2
      %v1848 = vrot.slane %v1402, 2
      %v1849 = vsel %vm795, %v1847, %v1848
      %v1850 = vrot.slane %v1403, 2
      %v1851 = vsel %vm795, %v1848, %v1850
      %v1852 = vrot.slane %v1816, 2
      %v1853 = vrot.slane %v1405, 2
      %v1854 = vsel %vm795, %v1852, %v1853
      %v1855 = vrot.slane %v1406, 2
      %v1856 = vsel %vm795, %v1853, %v1855
      %v1857 = vrot.slane %v1817, 2
      %v1858 = vrot.slane %v1408, 2
      %v1859 = vsel %vm795, %v1857, %v1858
      %v1860 = vrot.slane %v1409, 2
      %v1861 = vsel %vm795, %v1858, %v1860
      %v1862 = vrot.slane %v1818, 2
      %v1863 = vrot.slane %v1411, 2
      %v1864 = vsel %vm795, %v1862, %v1863
      %v1865 = vrot.slane %v1412, 2
      %v1866 = vsel %vm795, %v1863, %v1865
      %v1867 = vrot.slane %v1819, 2
      %v1868 = vrot.slane %v1414, 2
      %v1869 = vsel %vm795, %v1867, %v1868
      %v1870 = vrot.slane %v1415, 2
      %v1871 = vsel %vm795, %v1868, %v1870
      %v1872 = vrot.slane %v1820, 2
      %v1873 = vrot.slane %v1417, 2
      %v1874 = vsel %vm795, %v1872, %v1873
      %v1875 = vrot.slane %v1418, 2
      %v1876 = vsel %vm795, %v1873, %v1875
      %v1877 = vrot.slane %v1821, 2
      %v1878 = vrot.slane %v1420, 2
      %v1879 = vsel %vm795, %v1877, %v1878
      %v1880 = vrot.slane %v1421, 2
      %v1881 = vsel %vm795, %v1878, %v1880
      %v1882 = vrot.slane %v1822, 2
      %v1883 = vrot.slane %v1423, 2
      %v1884 = vsel %vm795, %v1882, %v1883
      %v1885 = vrot.slane %v1424, 2
      %v1886 = vsel %vm795, %v1883, %v1885
      %v1887 = vrot.slane %v1823, 2
      %v1888 = vrot.slane %v1426, 2
      %v1889 = vsel %vm795, %v1887, %v1888
      %v1890 = vrot.slane %v1427, 2
      %v1891 = vsel %vm795, %v1888, %v1890
      %v1892 = vrot.slane %v1824, 2
      %v1893 = vrot.slane %v1429, 2
      %v1894 = vsel %vm795, %v1892, %v1893
      %v1895 = vrot.slane %v1430, 2
      %v1896 = vsel %vm795, %v1893, %v1895
      %v1897 = vrot.slane %v1825, 2
      %v1898 = vrot.slane %v1432, 2
      %v1899 = vsel %vm795, %v1897, %v1898
      %v1900 = vrot.slane %v1433, 2
      %v1901 = vsel %vm795, %v1898, %v1900
      %v1902 = vrot.slane %v1826, 2
      %v1903 = vrot.slane %v1435, 2
      %v1904 = vsel %vm795, %v1902, %v1903
      %v1905 = vrot.slane %v1436, 2
      %v1906 = vsel %vm795, %v1903, %v1905
      %v1907 = vrot.slane %v1827, 2
      %v1908 = vrot.slane %v1438, 2
      %v1909 = vsel %vm795, %v1907, %v1908
      %v1910 = vrot.slane %v1439, 2
      %v1911 = vsel %vm795, %v1908, %v1910
      %v1912 = vrot.slane %v1828, 2
      %v1913 = vrot.slane %v1441, 2
      %v1914 = vsel %vm795, %v1912, %v1913
      %v1915 = vrot.slane %v1442, 2
      %v1916 = vsel %vm795, %v1913, %v1915
      %v1917 = vrot.slane %v1829, 2
      %v1918 = vrot.slane %v1444, 2
      %v1919 = vsel %vm795, %v1917, %v1918
      %v1920 = vrot.slane %v1445, 2
      %v1921 = vsel %vm795, %v1918, %v1920
      %v1922 = vrot.slane %v1830, 2
      %v1923 = vrot.slane %v1447, 2
      %v1924 = vsel %vm795, %v1922, %v1923
      %v1925 = vrot.slane %v1448, 2
      %v1926 = vsel %vm795, %v1923, %v1925
      %v1959 = vpack.c.bf16 %v1851, %v1849
      %v1960 = vpack.c.bf16 %v1856, %v1854
      %v1961 = vpack.c.bf16 %v1861, %v1859
      %v1962 = vpack.c.bf16 %v1866, %v1864
      %v1963 = vpack.c.bf16 %v1871, %v1869
      %v1964 = vpack.c.bf16 %v1876, %v1874
      %v1965 = vpack.c.bf16 %v1881, %v1879
      %v1966 = vpack.c.bf16 %v1886, %v1884
      %v1967 = vpack.c.bf16 %v1891, %v1889
      %v1968 = vpack.c.bf16 %v1896, %v1894
      %v1969 = vpack.c.bf16 %v1901, %v1899
      %v1970 = vpack.c.bf16 %v1906, %v1904
      %v1971 = vpack.c.bf16 %v1911, %v1909
      %v1972 = vpack.c.bf16 %v1916, %v1914
      %v1973 = vpack.c.bf16 %v1921, %v1919
      %v1974 = vpack.c.bf16 %v1926, %v1924
      %s1975 = scalar_lea.vmem %s1, 10
      %v1976 = vld [vmem:[%s1975] sm:$0x3]
      %v1978 = vsel %vm465, %v1959, 0
      %v1981 = vsel %vm465, %v1960, 0
      %v1984 = vsel %vm465, %v1961, 0
      %v1987 = vsel %vm465, %v1962, 0
      %v1990 = vsel %vm465, %v1963, 0
      %v1993 = vsel %vm465, %v1964, 0
      %v1996 = vsel %vm465, %v1965, 0
      %v1999 = vsel %vm465, %v1966, 0
      %v2002 = vsel %vm465, %v1967, 0
      %v2005 = vsel %vm465, %v1968, 0
      %v2008 = vsel %vm465, %v1969, 0
      %v2011 = vsel %vm465, %v1970, 0
      %v2014 = vsel %vm465, %v1971, 0
      %v2017 = vsel %vm465, %v1972, 0
      %v2020 = vsel %vm465, %v1973, 0
      %v2023 = vsel %vm465, %v1974, 0
      %v2026 = vsel %vm514, %v1976, 0
      %2028 = vmatpush.bf16.msra.mxu0 0
      %2029 = vmatpush.bf16.msra.mxu0 0
      %2030 = vmatpush.bf16.msra.mxu0 0
      %2031 = vmatpush.bf16.msra.mxu0 0
      %2032 = vmatpush.bf16.msra.mxu0 0
      %2033 = vmatpush.bf16.msra.mxu0 0
      %2034 = vmatpush.bf16.msra.mxu0 0
      %2035 = vmatpush.bf16.msra.mxu0 %v2026
      %2036 = vmatmul.bf16.gmra.mxu0 %v1978
      %v2037 = vpop.f32.mrf.mxu0
      %v2038 = vadd.f32 0.0, %v2037
      %v2039 = vpop.f32.mrf.mxu0
      %v2040 = vadd.f32 0.0, %v2039
      %2041 = vmatmul.bf16.gmra.mxu0 %v1981
      %v2042 = vpop.f32.mrf.mxu0
      %v2043 = vadd.f32 0.0, %v2042
      %v2044 = vpop.f32.mrf.mxu0
      %v2045 = vadd.f32 0.0, %v2044
      %2046 = vmatmul.bf16.gmra.mxu0 %v1984
      %v2047 = vpop.f32.mrf.mxu0
      %v2048 = vadd.f32 0.0, %v2047
      %v2049 = vpop.f32.mrf.mxu0
      %v2050 = vadd.f32 0.0, %v2049
      %2051 = vmatmul.bf16.gmra.mxu0 %v1987
      %v2052 = vpop.f32.mrf.mxu0
      %v2053 = vadd.f32 0.0, %v2052
      %v2054 = vpop.f32.mrf.mxu0
      %v2055 = vadd.f32 0.0, %v2054
      %2056 = vmatmul.bf16.gmra.mxu0 %v1990
      %v2057 = vpop.f32.mrf.mxu0
      %v2058 = vadd.f32 0.0, %v2057
      %v2059 = vpop.f32.mrf.mxu0
      %v2060 = vadd.f32 0.0, %v2059
      %2061 = vmatmul.bf16.gmra.mxu0 %v1993
      %v2062 = vpop.f32.mrf.mxu0
      %v2063 = vadd.f32 0.0, %v2062
      %v2064 = vpop.f32.mrf.mxu0
      %v2065 = vadd.f32 0.0, %v2064
      %2066 = vmatmul.bf16.gmra.mxu0 %v1996
      %v2067 = vpop.f32.mrf.mxu0
      %v2068 = vadd.f32 0.0, %v2067
      %v2069 = vpop.f32.mrf.mxu0
      %v2070 = vadd.f32 0.0, %v2069
      %2071 = vmatmul.bf16.gmra.mxu0 %v1999
      %v2072 = vpop.f32.mrf.mxu0
      %v2073 = vadd.f32 0.0, %v2072
      %v2074 = vpop.f32.mrf.mxu0
      %v2075 = vadd.f32 0.0, %v2074
      %2076 = vmatmul.bf16.gmra.mxu0 %v2002
      %v2077 = vpop.f32.mrf.mxu0
      %v2078 = vadd.f32 0.0, %v2077
      %v2079 = vpop.f32.mrf.mxu0
      %v2080 = vadd.f32 0.0, %v2079
      %2081 = vmatmul.bf16.gmra.mxu0 %v2005
      %v2082 = vpop.f32.mrf.mxu0
      %v2083 = vadd.f32 0.0, %v2082
      %v2084 = vpop.f32.mrf.mxu0
      %v2085 = vadd.f32 0.0, %v2084
      %2086 = vmatmul.bf16.gmra.mxu0 %v2008
      %v2087 = vpop.f32.mrf.mxu0
      %v2088 = vadd.f32 0.0, %v2087
      %v2089 = vpop.f32.mrf.mxu0
      %v2090 = vadd.f32 0.0, %v2089
      %2091 = vmatmul.bf16.gmra.mxu0 %v2011
      %v2092 = vpop.f32.mrf.mxu0
      %v2093 = vadd.f32 0.0, %v2092
      %v2094 = vpop.f32.mrf.mxu0
      %v2095 = vadd.f32 0.0, %v2094
      %2096 = vmatmul.bf16.gmra.mxu0 %v2014
      %v2097 = vpop.f32.mrf.mxu0
      %v2098 = vadd.f32 0.0, %v2097
      %v2099 = vpop.f32.mrf.mxu0
      %v2100 = vadd.f32 0.0, %v2099
      %2101 = vmatmul.bf16.gmra.mxu0 %v2017
      %v2102 = vpop.f32.mrf.mxu0
      %v2103 = vadd.f32 0.0, %v2102
      %v2104 = vpop.f32.mrf.mxu0
      %v2105 = vadd.f32 0.0, %v2104
      %2106 = vmatmul.bf16.gmra.mxu0 %v2020
      %v2107 = vpop.f32.mrf.mxu0
      %v2108 = vadd.f32 0.0, %v2107
      %v2109 = vpop.f32.mrf.mxu0
      %v2110 = vadd.f32 0.0, %v2109
      %2111 = vmatmul.bf16.gmra.mxu0 %v2023
      %v2112 = vpop.f32.mrf.mxu0
      %v2113 = vadd.f32 0.0, %v2112
      %v2114 = vpop.f32.mrf.mxu0
      %v2115 = vadd.f32 0.0, %v2114
      %2116 = vdwg.mxu0
      %v2117 = vadd.f32 %v1767, %v2038
      %v2118 = vadd.f32 %v1768, %v2040
      %v2119 = vadd.f32 %v1769, %v2043
      %v2120 = vadd.f32 %v1770, %v2045
      %v2121 = vadd.f32 %v1771, %v2048
      %v2122 = vadd.f32 %v1772, %v2050
      %v2123 = vadd.f32 %v1773, %v2053
      %v2124 = vadd.f32 %v1774, %v2055
      %v2125 = vadd.f32 %v1775, %v2058
      %v2126 = vadd.f32 %v1776, %v2060
      %v2127 = vadd.f32 %v1777, %v2063
      %v2128 = vadd.f32 %v1778, %v2065
      %v2129 = vadd.f32 %v1779, %v2068
      %v2130 = vadd.f32 %v1780, %v2070
      %v2131 = vadd.f32 %v1781, %v2073
      %v2132 = vadd.f32 %v1782, %v2075
      %v2133 = vadd.f32 %v1783, %v2078
      %v2134 = vadd.f32 %v1784, %v2080
      %v2135 = vadd.f32 %v1785, %v2083
      %v2136 = vadd.f32 %v1786, %v2085
      %v2137 = vadd.f32 %v1787, %v2088
      %v2138 = vadd.f32 %v1788, %v2090
      %v2139 = vadd.f32 %v1789, %v2093
      %v2140 = vadd.f32 %v1790, %v2095
      %v2141 = vadd.f32 %v1791, %v2098
      %v2142 = vadd.f32 %v1792, %v2100
      %v2143 = vadd.f32 %v1793, %v2103
      %v2144 = vadd.f32 %v1794, %v2105
      %v2145 = vadd.f32 %v1795, %v2108
      %v2146 = vadd.f32 %v1796, %v2110
      %v2147 = vadd.f32 %v1797, %v2113
      %v2148 = vadd.f32 %v1798, %v2115
      %s2149 = scalar_lea.vmem %s165, 24
      %v2150 = vld [vmem:[%s2149] sm:$0xf]
      %v2151 = vld [vmem:[%s2149 + $0x4] sm:$0xf]
      %v2152 = vld [vmem:[%s2149 + $0xc] sm:$0xf]
      %v2153 = vld [vmem:[%s2149 + $0x10] sm:$0xf]
      %v2154 = vld [vmem:[%s2149 + $0x18] sm:$0xf]
      %v2155 = vld [vmem:[%s2149 + $0x1c] sm:$0xf]
      %v2156 = vld [vmem:[%s2149 + $0x24] sm:$0xf]
      %v2157 = vld [vmem:[%s2149 + $0x28] sm:$0xf]
      %v2158 = vld [vmem:[%s2149 + $0x30] sm:$0xf]
      %v2159 = vld [vmem:[%s2149 + $0x34] sm:$0xf]
      %v2160 = vld [vmem:[%s2149 + $0x3c] sm:$0xf]
      %v2161 = vld [vmem:[%s2149 + $0x40] sm:$0xf]
      %v2162 = vld [vmem:[%s2149 + $0x48] sm:$0xf]
      %v2163 = vld [vmem:[%s2149 + $0x4c] sm:$0xf]
      %v2164 = vld [vmem:[%s2149 + $0x54] sm:$0xf]
      %v2165 = vld [vmem:[%s2149 + $0x58] sm:$0xf]
      %v2166 = vld [vmem:[%s2149 + $0x60] sm:$0xf]
      %v2167 = vld [vmem:[%s2149 + $0x64] sm:$0xf]
      %v2168 = vld [vmem:[%s2149 + $0x6c] sm:$0xf]
      %v2169 = vld [vmem:[%s2149 + $0x70] sm:$0xf]
      %v2170 = vld [vmem:[%s2149 + $0x78] sm:$0xf]
      %v2171 = vld [vmem:[%s2149 + $0x7c] sm:$0xf]
      %v2172 = vld [vmem:[%s2149 + $0x84] sm:$0xf]
      %v2173 = vld [vmem:[%s2149 + $0x88] sm:$0xf]
      %v2174 = vld [vmem:[%s2149 + $0x90] sm:$0xf]
      %v2175 = vld [vmem:[%s2149 + $0x94] sm:$0xf]
      %v2176 = vld [vmem:[%s2149 + $0x9c] sm:$0xf]
      %v2177 = vld [vmem:[%s2149 + $0xa0] sm:$0xf]
      %v2178 = vld [vmem:[%s2149 + $0xa8] sm:$0xf]
      %v2179 = vld [vmem:[%s2149 + $0xac] sm:$0xf]
      %v2180 = vld [vmem:[%s2149 + $0xb4] sm:$0xf]
      %v2181 = vld [vmem:[%s2149 + $0xb8] sm:$0xf]
      %v2182 = vunpack.c.l.bf16 %v2150
      %v2183 = vunpack.c.l.bf16 %v2151
      %v2184 = vunpack.c.l.bf16 %v2152
      %v2185 = vunpack.c.l.bf16 %v2153
      %v2186 = vunpack.c.l.bf16 %v2154
      %v2187 = vunpack.c.l.bf16 %v2155
      %v2188 = vunpack.c.l.bf16 %v2156
      %v2189 = vunpack.c.l.bf16 %v2157
      %v2190 = vunpack.c.l.bf16 %v2158
      %v2191 = vunpack.c.l.bf16 %v2159
      %v2192 = vunpack.c.l.bf16 %v2160
      %v2193 = vunpack.c.l.bf16 %v2161
      %v2194 = vunpack.c.l.bf16 %v2162
      %v2195 = vunpack.c.l.bf16 %v2163
      %v2196 = vunpack.c.l.bf16 %v2164
      %v2197 = vunpack.c.l.bf16 %v2165
      %v2198 = vunpack.c.l.bf16 %v2166
      %v2199 = vunpack.c.l.bf16 %v2167
      %v2200 = vunpack.c.l.bf16 %v2168
      %v2201 = vunpack.c.l.bf16 %v2169
      %v2202 = vunpack.c.l.bf16 %v2170
      %v2203 = vunpack.c.l.bf16 %v2171
      %v2204 = vunpack.c.l.bf16 %v2172
      %v2205 = vunpack.c.l.bf16 %v2173
      %v2206 = vunpack.c.l.bf16 %v2174
      %v2207 = vunpack.c.l.bf16 %v2175
      %v2208 = vunpack.c.l.bf16 %v2176
      %v2209 = vunpack.c.l.bf16 %v2177
      %v2210 = vunpack.c.l.bf16 %v2178
      %v2211 = vunpack.c.l.bf16 %v2179
      %v2212 = vunpack.c.l.bf16 %v2180
      %v2213 = vunpack.c.l.bf16 %v2181
      %v2214 = vpack.c.bf16 %v2183, %v2182
      %v2215 = vpack.c.bf16 %v2185, %v2184
      %v2216 = vpack.c.bf16 %v2187, %v2186
      %v2217 = vpack.c.bf16 %v2189, %v2188
      %v2218 = vpack.c.bf16 %v2191, %v2190
      %v2219 = vpack.c.bf16 %v2193, %v2192
      %v2220 = vpack.c.bf16 %v2195, %v2194
      %v2221 = vpack.c.bf16 %v2197, %v2196
      %v2222 = vpack.c.bf16 %v2199, %v2198
      %v2223 = vpack.c.bf16 %v2201, %v2200
      %v2224 = vpack.c.bf16 %v2203, %v2202
      %v2225 = vpack.c.bf16 %v2205, %v2204
      %v2226 = vpack.c.bf16 %v2207, %v2206
      %v2227 = vpack.c.bf16 %v2209, %v2208
      %v2228 = vpack.c.bf16 %v2211, %v2210
      %v2229 = vpack.c.bf16 %v2213, %v2212
      %s2230 = scalar_lea.vmem %s1, 12
      %v2231 = vld [vmem:[%s2230] sm:$0x3]
      %v2233 = vsel %vm465, %v2214, 0
      %v2236 = vsel %vm465, %v2215, 0
      %v2239 = vsel %vm465, %v2216, 0
      %v2242 = vsel %vm465, %v2217, 0
      %v2245 = vsel %vm465, %v2218, 0
      %v2248 = vsel %vm465, %v2219, 0
      %v2251 = vsel %vm465, %v2220, 0
      %v2254 = vsel %vm465, %v2221, 0
      %v2257 = vsel %vm465, %v2222, 0
      %v2260 = vsel %vm465, %v2223, 0
      %v2263 = vsel %vm465, %v2224, 0
      %v2266 = vsel %vm465, %v2225, 0
      %v2269 = vsel %vm465, %v2226, 0
      %v2272 = vsel %vm465, %v2227, 0
      %v2275 = vsel %vm465, %v2228, 0
      %v2278 = vsel %vm465, %v2229, 0
      %v2281 = vsel %vm514, %v2231, 0
      %2283 = vmatpush.bf16.msra.mxu0 0
      %2284 = vmatpush.bf16.msra.mxu0 0
      %2285 = vmatpush.bf16.msra.mxu0 0
      %2286 = vmatpush.bf16.msra.mxu0 0
      %2287 = vmatpush.bf16.msra.mxu0 0
      %2288 = vmatpush.bf16.msra.mxu0 0
      %2289 = vmatpush.bf16.msra.mxu0 0
      %2290 = vmatpush.bf16.msra.mxu0 %v2281
      %2291 = vmatmul.bf16.gmra.mxu0 %v2233
      %v2292 = vpop.f32.mrf.mxu0
      %v2293 = vadd.f32 0.0, %v2292
      %v2294 = vpop.f32.mrf.mxu0
      %v2295 = vadd.f32 0.0, %v2294
      %2296 = vmatmul.bf16.gmra.mxu0 %v2236
      %v2297 = vpop.f32.mrf.mxu0
      %v2298 = vadd.f32 0.0, %v2297
      %v2299 = vpop.f32.mrf.mxu0
      %v2300 = vadd.f32 0.0, %v2299
      %2301 = vmatmul.bf16.gmra.mxu0 %v2239
      %v2302 = vpop.f32.mrf.mxu0
      %v2303 = vadd.f32 0.0, %v2302
      %v2304 = vpop.f32.mrf.mxu0
      %v2305 = vadd.f32 0.0, %v2304
      %2306 = vmatmul.bf16.gmra.mxu0 %v2242
      %v2307 = vpop.f32.mrf.mxu0
      %v2308 = vadd.f32 0.0, %v2307
      %v2309 = vpop.f32.mrf.mxu0
      %v2310 = vadd.f32 0.0, %v2309
      %2311 = vmatmul.bf16.gmra.mxu0 %v2245
      %v2312 = vpop.f32.mrf.mxu0
      %v2313 = vadd.f32 0.0, %v2312
      %v2314 = vpop.f32.mrf.mxu0
      %v2315 = vadd.f32 0.0, %v2314
      %2316 = vmatmul.bf16.gmra.mxu0 %v2248
      %v2317 = vpop.f32.mrf.mxu0
      %v2318 = vadd.f32 0.0, %v2317
      %v2319 = vpop.f32.mrf.mxu0
      %v2320 = vadd.f32 0.0, %v2319
      %2321 = vmatmul.bf16.gmra.mxu0 %v2251
      %v2322 = vpop.f32.mrf.mxu0
      %v2323 = vadd.f32 0.0, %v2322
      %v2324 = vpop.f32.mrf.mxu0
      %v2325 = vadd.f32 0.0, %v2324
      %2326 = vmatmul.bf16.gmra.mxu0 %v2254
      %v2327 = vpop.f32.mrf.mxu0
      %v2328 = vadd.f32 0.0, %v2327
      %v2329 = vpop.f32.mrf.mxu0
      %v2330 = vadd.f32 0.0, %v2329
      %2331 = vmatmul.bf16.gmra.mxu0 %v2257
      %v2332 = vpop.f32.mrf.mxu0
      %v2333 = vadd.f32 0.0, %v2332
      %v2334 = vpop.f32.mrf.mxu0
      %v2335 = vadd.f32 0.0, %v2334
      %2336 = vmatmul.bf16.gmra.mxu0 %v2260
      %v2337 = vpop.f32.mrf.mxu0
      %v2338 = vadd.f32 0.0, %v2337
      %v2339 = vpop.f32.mrf.mxu0
      %v2340 = vadd.f32 0.0, %v2339
      %2341 = vmatmul.bf16.gmra.mxu0 %v2263
      %v2342 = vpop.f32.mrf.mxu0
      %v2343 = vadd.f32 0.0, %v2342
      %v2344 = vpop.f32.mrf.mxu0
      %v2345 = vadd.f32 0.0, %v2344
      %2346 = vmatmul.bf16.gmra.mxu0 %v2266
      %v2347 = vpop.f32.mrf.mxu0
      %v2348 = vadd.f32 0.0, %v2347
      %v2349 = vpop.f32.mrf.mxu0
      %v2350 = vadd.f32 0.0, %v2349
      %2351 = vmatmul.bf16.gmra.mxu0 %v2269
      %v2352 = vpop.f32.mrf.mxu0
      %v2353 = vadd.f32 0.0, %v2352
      %v2354 = vpop.f32.mrf.mxu0
      %v2355 = vadd.f32 0.0, %v2354
      %2356 = vmatmul.bf16.gmra.mxu0 %v2272
      %v2357 = vpop.f32.mrf.mxu0
      %v2358 = vadd.f32 0.0, %v2357
      %v2359 = vpop.f32.mrf.mxu0
      %v2360 = vadd.f32 0.0, %v2359
      %2361 = vmatmul.bf16.gmra.mxu0 %v2275
      %v2362 = vpop.f32.mrf.mxu0
      %v2363 = vadd.f32 0.0, %v2362
      %v2364 = vpop.f32.mrf.mxu0
      %v2365 = vadd.f32 0.0, %v2364
      %2366 = vmatmul.bf16.gmra.mxu0 %v2278
      %v2367 = vpop.f32.mrf.mxu0
      %v2368 = vadd.f32 0.0, %v2367
      %v2369 = vpop.f32.mrf.mxu0
      %v2370 = vadd.f32 0.0, %v2369
      %2371 = vdwg.mxu0
      %v2372 = vadd.f32 %v2117, %v2293
      %v2373 = vadd.f32 %v2118, %v2295
      %v2374 = vadd.f32 %v2119, %v2298
      %v2375 = vadd.f32 %v2120, %v2300
      %v2376 = vadd.f32 %v2121, %v2303
      %v2377 = vadd.f32 %v2122, %v2305
      %v2378 = vadd.f32 %v2123, %v2308
      %v2379 = vadd.f32 %v2124, %v2310
      %v2380 = vadd.f32 %v2125, %v2313
      %v2381 = vadd.f32 %v2126, %v2315
      %v2382 = vadd.f32 %v2127, %v2318
      %v2383 = vadd.f32 %v2128, %v2320
      %v2384 = vadd.f32 %v2129, %v2323
      %v2385 = vadd.f32 %v2130, %v2325
      %v2386 = vadd.f32 %v2131, %v2328
      %v2387 = vadd.f32 %v2132, %v2330
      %v2388 = vadd.f32 %v2133, %v2333
      %v2389 = vadd.f32 %v2134, %v2335
      %v2390 = vadd.f32 %v2135, %v2338
      %v2391 = vadd.f32 %v2136, %v2340
      %v2392 = vadd.f32 %v2137, %v2343
      %v2393 = vadd.f32 %v2138, %v2345
      %v2394 = vadd.f32 %v2139, %v2348
      %v2395 = vadd.f32 %v2140, %v2350
      %v2396 = vadd.f32 %v2141, %v2353
      %v2397 = vadd.f32 %v2142, %v2355
      %v2398 = vadd.f32 %v2143, %v2358
      %v2399 = vadd.f32 %v2144, %v2360
      %v2400 = vadd.f32 %v2145, %v2363
      %v2401 = vadd.f32 %v2146, %v2365
      %v2402 = vadd.f32 %v2147, %v2368
      %v2403 = vadd.f32 %v2148, %v2370
      %v2404 = vld [vmem:[%s2149] sm:$0xf]
      %v2405 = vld [vmem:[%s2149 + $0x4] sm:$0xf]
      %v2406 = vld [vmem:[%s2149 + $0x8] sm:$0x1]
      %v2407 = vld [vmem:[%s2149 + $0xc] sm:$0xf]
      %v2408 = vld [vmem:[%s2149 + $0x10] sm:$0xf]
      %v2409 = vld [vmem:[%s2149 + $0x14] sm:$0x1]
      %v2410 = vld [vmem:[%s2149 + $0x18] sm:$0xf]
      %v2411 = vld [vmem:[%s2149 + $0x1c] sm:$0xf]
      %v2412 = vld [vmem:[%s2149 + $0x20] sm:$0x1]
      %v2413 = vld [vmem:[%s2149 + $0x24] sm:$0xf]
      %v2414 = vld [vmem:[%s2149 + $0x28] sm:$0xf]
      %v2415 = vld [vmem:[%s2149 + $0x2c] sm:$0x1]
      %v2416 = vld [vmem:[%s2149 + $0x30] sm:$0xf]
      %v2417 = vld [vmem:[%s2149 + $0x34] sm:$0xf]
      %v2418 = vld [vmem:[%s2149 + $0x38] sm:$0x1]
      %v2419 = vld [vmem:[%s2149 + $0x3c] sm:$0xf]
      %v2420 = vld [vmem:[%s2149 + $0x40] sm:$0xf]
      %v2421 = vld [vmem:[%s2149 + $0x44] sm:$0x1]
      %v2422 = vld [vmem:[%s2149 + $0x48] sm:$0xf]
      %v2423 = vld [vmem:[%s2149 + $0x4c] sm:$0xf]
      %v2424 = vld [vmem:[%s2149 + $0x50] sm:$0x1]
      %v2425 = vld [vmem:[%s2149 + $0x54] sm:$0xf]
      %v2426 = vld [vmem:[%s2149 + $0x58] sm:$0xf]
      %v2427 = vld [vmem:[%s2149 + $0x5c] sm:$0x1]
      %v2428 = vld [vmem:[%s2149 + $0x60] sm:$0xf]
      %v2429 = vld [vmem:[%s2149 + $0x64] sm:$0xf]
      %v2430 = vld [vmem:[%s2149 + $0x68] sm:$0x1]
      %v2431 = vld [vmem:[%s2149 + $0x6c] sm:$0xf]
      %v2432 = vld [vmem:[%s2149 + $0x70] sm:$0xf]
      %v2433 = vld [vmem:[%s2149 + $0x74] sm:$0x1]
      %v2434 = vld [vmem:[%s2149 + $0x78] sm:$0xf]
      %v2435 = vld [vmem:[%s2149 + $0x7c] sm:$0xf]
      %v2436 = vld [vmem:[%s2149 + $0x80] sm:$0x1]
      %v2437 = vld [vmem:[%s2149 + $0x84] sm:$0xf]
      %v2438 = vld [vmem:[%s2149 + $0x88] sm:$0xf]
      %v2439 = vld [vmem:[%s2149 + $0x8c] sm:$0x1]
      %v2440 = vld [vmem:[%s2149 + $0x90] sm:$0xf]
      %v2441 = vld [vmem:[%s2149 + $0x94] sm:$0xf]
      %v2442 = vld [vmem:[%s2149 + $0x98] sm:$0x1]
      %v2443 = vld [vmem:[%s2149 + $0x9c] sm:$0xf]
      %v2444 = vld [vmem:[%s2149 + $0xa0] sm:$0xf]
      %v2445 = vld [vmem:[%s2149 + $0xa4] sm:$0x1]
      %v2446 = vld [vmem:[%s2149 + $0xa8] sm:$0xf]
      %v2447 = vld [vmem:[%s2149 + $0xac] sm:$0xf]
      %v2448 = vld [vmem:[%s2149 + $0xb0] sm:$0x1]
      %v2449 = vld [vmem:[%s2149 + $0xb4] sm:$0xf]
      %v2450 = vld [vmem:[%s2149 + $0xb8] sm:$0xf]
      %v2451 = vld [vmem:[%s2149 + $0xbc] sm:$0x1]
      %v2452 = vunpack.c.l.bf16 %v2404
      %v2453 = vunpack.c.l.bf16 %v2405
      %v2454 = vunpack.c.l.bf16 %v2406
      %v2455 = vunpack.c.l.bf16 %v2407
      %v2456 = vunpack.c.l.bf16 %v2408
      %v2457 = vunpack.c.l.bf16 %v2409
      %v2458 = vunpack.c.l.bf16 %v2410
      %v2459 = vunpack.c.l.bf16 %v2411
      %v2460 = vunpack.c.l.bf16 %v2412
      %v2461 = vunpack.c.l.bf16 %v2413
      %v2462 = vunpack.c.l.bf16 %v2414
      %v2463 = vunpack.c.l.bf16 %v2415
      %v2464 = vunpack.c.l.bf16 %v2416
      %v2465 = vunpack.c.l.bf16 %v2417
      %v2466 = vunpack.c.l.bf16 %v2418
      %v2467 = vunpack.c.l.bf16 %v2419
      %v2468 = vunpack.c.l.bf16 %v2420
      %v2469 = vunpack.c.l.bf16 %v2421
      %v2470 = vunpack.c.l.bf16 %v2422
      %v2471 = vunpack.c.l.bf16 %v2423
      %v2472 = vunpack.c.l.bf16 %v2424
      %v2473 = vunpack.c.l.bf16 %v2425
      %v2474 = vunpack.c.l.bf16 %v2426
      %v2475 = vunpack.c.l.bf16 %v2427
      %v2476 = vunpack.c.l.bf16 %v2428
      %v2477 = vunpack.c.l.bf16 %v2429
      %v2478 = vunpack.c.l.bf16 %v2430
      %v2479 = vunpack.c.l.bf16 %v2431
      %v2480 = vunpack.c.l.bf16 %v2432
      %v2481 = vunpack.c.l.bf16 %v2433
      %v2482 = vunpack.c.l.bf16 %v2434
      %v2483 = vunpack.c.l.bf16 %v2435
      %v2484 = vunpack.c.l.bf16 %v2436
      %v2485 = vunpack.c.l.bf16 %v2437
      %v2486 = vunpack.c.l.bf16 %v2438
      %v2487 = vunpack.c.l.bf16 %v2439
      %v2488 = vunpack.c.l.bf16 %v2440
      %v2489 = vunpack.c.l.bf16 %v2441
      %v2490 = vunpack.c.l.bf16 %v2442
      %v2491 = vunpack.c.l.bf16 %v2443
      %v2492 = vunpack.c.l.bf16 %v2444
      %v2493 = vunpack.c.l.bf16 %v2445
      %v2494 = vunpack.c.l.bf16 %v2446
      %v2495 = vunpack.c.l.bf16 %v2447
      %v2496 = vunpack.c.l.bf16 %v2448
      %v2497 = vunpack.c.l.bf16 %v2449
      %v2498 = vunpack.c.l.bf16 %v2450
      %v2499 = vunpack.c.l.bf16 %v2451
      %v2548 = vrot.slane %v2452, 1
      %v2549 = vrot.slane %v2453, 1
      %v2550 = vsel %vm334, %v2548, %v2549
      %v2551 = vrot.slane %v2454, 1
      %v2552 = vsel %vm334, %v2549, %v2551
      %v2553 = vrot.slane %v2455, 1
      %v2554 = vrot.slane %v2456, 1
      %v2555 = vsel %vm334, %v2553, %v2554
      %v2556 = vrot.slane %v2457, 1
      %v2557 = vsel %vm334, %v2554, %v2556
      %v2558 = vrot.slane %v2458, 1
      %v2559 = vrot.slane %v2459, 1
      %v2560 = vsel %vm334, %v2558, %v2559
      %v2561 = vrot.slane %v2460, 1
      %v2562 = vsel %vm334, %v2559, %v2561
      %v2563 = vrot.slane %v2461, 1
      %v2564 = vrot.slane %v2462, 1
      %v2565 = vsel %vm334, %v2563, %v2564
      %v2566 = vrot.slane %v2463, 1
      %v2567 = vsel %vm334, %v2564, %v2566
      %v2568 = vrot.slane %v2464, 1
      %v2569 = vrot.slane %v2465, 1
      %v2570 = vsel %vm334, %v2568, %v2569
      %v2571 = vrot.slane %v2466, 1
      %v2572 = vsel %vm334, %v2569, %v2571
      %v2573 = vrot.slane %v2467, 1
      %v2574 = vrot.slane %v2468, 1
      %v2575 = vsel %vm334, %v2573, %v2574
      %v2576 = vrot.slane %v2469, 1
      %v2577 = vsel %vm334, %v2574, %v2576
      %v2578 = vrot.slane %v2470, 1
      %v2579 = vrot.slane %v2471, 1
      %v2580 = vsel %vm334, %v2578, %v2579
      %v2581 = vrot.slane %v2472, 1
      %v2582 = vsel %vm334, %v2579, %v2581
      %v2583 = vrot.slane %v2473, 1
      %v2584 = vrot.slane %v2474, 1
      %v2585 = vsel %vm334, %v2583, %v2584
      %v2586 = vrot.slane %v2475, 1
      %v2587 = vsel %vm334, %v2584, %v2586
      %v2588 = vrot.slane %v2476, 1
      %v2589 = vrot.slane %v2477, 1
      %v2590 = vsel %vm334, %v2588, %v2589
      %v2591 = vrot.slane %v2478, 1
      %v2592 = vsel %vm334, %v2589, %v2591
      %v2593 = vrot.slane %v2479, 1
      %v2594 = vrot.slane %v2480, 1
      %v2595 = vsel %vm334, %v2593, %v2594
      %v2596 = vrot.slane %v2481, 1
      %v2597 = vsel %vm334, %v2594, %v2596
      %v2598 = vrot.slane %v2482, 1
      %v2599 = vrot.slane %v2483, 1
      %v2600 = vsel %vm334, %v2598, %v2599
      %v2601 = vrot.slane %v2484, 1
      %v2602 = vsel %vm334, %v2599, %v2601
      %v2603 = vrot.slane %v2485, 1
      %v2604 = vrot.slane %v2486, 1
      %v2605 = vsel %vm334, %v2603, %v2604
      %v2606 = vrot.slane %v2487, 1
      %v2607 = vsel %vm334, %v2604, %v2606
      %v2608 = vrot.slane %v2488, 1
      %v2609 = vrot.slane %v2489, 1
      %v2610 = vsel %vm334, %v2608, %v2609
      %v2611 = vrot.slane %v2490, 1
      %v2612 = vsel %vm334, %v2609, %v2611
      %v2613 = vrot.slane %v2491, 1
      %v2614 = vrot.slane %v2492, 1
      %v2615 = vsel %vm334, %v2613, %v2614
      %v2616 = vrot.slane %v2493, 1
      %v2617 = vsel %vm334, %v2614, %v2616
      %v2618 = vrot.slane %v2494, 1
      %v2619 = vrot.slane %v2495, 1
      %v2620 = vsel %vm334, %v2618, %v2619
      %v2621 = vrot.slane %v2496, 1
      %v2622 = vsel %vm334, %v2619, %v2621
      %v2623 = vrot.slane %v2497, 1
      %v2624 = vrot.slane %v2498, 1
      %v2625 = vsel %vm334, %v2623, %v2624
      %v2626 = vrot.slane %v2499, 1
      %v2627 = vsel %vm334, %v2624, %v2626
      %v2660 = vpack.c.bf16 %v2552, %v2550
      %v2661 = vpack.c.bf16 %v2557, %v2555
      %v2662 = vpack.c.bf16 %v2562, %v2560
      %v2663 = vpack.c.bf16 %v2567, %v2565
      %v2664 = vpack.c.bf16 %v2572, %v2570
      %v2665 = vpack.c.bf16 %v2577, %v2575
      %v2666 = vpack.c.bf16 %v2582, %v2580
      %v2667 = vpack.c.bf16 %v2587, %v2585
      %v2668 = vpack.c.bf16 %v2592, %v2590
      %v2669 = vpack.c.bf16 %v2597, %v2595
      %v2670 = vpack.c.bf16 %v2602, %v2600
      %v2671 = vpack.c.bf16 %v2607, %v2605
      %v2672 = vpack.c.bf16 %v2612, %v2610
      %v2673 = vpack.c.bf16 %v2617, %v2615
      %v2674 = vpack.c.bf16 %v2622, %v2620
      %v2675 = vpack.c.bf16 %v2627, %v2625
      %s2676 = scalar_lea.vmem %s1, 14
      %v2677 = vld [vmem:[%s2676] sm:$0x3]
      %v2679 = vsel %vm465, %v2660, 0
      %v2682 = vsel %vm465, %v2661, 0
      %v2685 = vsel %vm465, %v2662, 0
      %v2688 = vsel %vm465, %v2663, 0
      %v2691 = vsel %vm465, %v2664, 0
      %v2694 = vsel %vm465, %v2665, 0
      %v2697 = vsel %vm465, %v2666, 0
      %v2700 = vsel %vm465, %v2667, 0
      %v2703 = vsel %vm465, %v2668, 0
      %v2706 = vsel %vm465, %v2669, 0
      %v2709 = vsel %vm465, %v2670, 0
      %v2712 = vsel %vm465, %v2671, 0
      %v2715 = vsel %vm465, %v2672, 0
      %v2718 = vsel %vm465, %v2673, 0
      %v2721 = vsel %vm465, %v2674, 0
      %v2724 = vsel %vm465, %v2675, 0
      %v2727 = vsel %vm514, %v2677, 0
      %2729 = vmatpush.bf16.msra.mxu0 0
      %2730 = vmatpush.bf16.msra.mxu0 0
      %2731 = vmatpush.bf16.msra.mxu0 0
      %2732 = vmatpush.bf16.msra.mxu0 0
      %2733 = vmatpush.bf16.msra.mxu0 0
      %2734 = vmatpush.bf16.msra.mxu0 0
      %2735 = vmatpush.bf16.msra.mxu0 0
      %2736 = vmatpush.bf16.msra.mxu0 %v2727
      %2737 = vmatmul.bf16.gmra.mxu0 %v2679
      %v2738 = vpop.f32.mrf.mxu0
      %v2739 = vadd.f32 0.0, %v2738
      %v2740 = vpop.f32.mrf.mxu0
      %v2741 = vadd.f32 0.0, %v2740
      %2742 = vmatmul.bf16.gmra.mxu0 %v2682
      %v2743 = vpop.f32.mrf.mxu0
      %v2744 = vadd.f32 0.0, %v2743
      %v2745 = vpop.f32.mrf.mxu0
      %v2746 = vadd.f32 0.0, %v2745
      %2747 = vmatmul.bf16.gmra.mxu0 %v2685
      %v2748 = vpop.f32.mrf.mxu0
      %v2749 = vadd.f32 0.0, %v2748
      %v2750 = vpop.f32.mrf.mxu0
      %v2751 = vadd.f32 0.0, %v2750
      %2752 = vmatmul.bf16.gmra.mxu0 %v2688
      %v2753 = vpop.f32.mrf.mxu0
      %v2754 = vadd.f32 0.0, %v2753
      %v2755 = vpop.f32.mrf.mxu0
      %v2756 = vadd.f32 0.0, %v2755
      %2757 = vmatmul.bf16.gmra.mxu0 %v2691
      %v2758 = vpop.f32.mrf.mxu0
      %v2759 = vadd.f32 0.0, %v2758
      %v2760 = vpop.f32.mrf.mxu0
      %v2761 = vadd.f32 0.0, %v2760
      %2762 = vmatmul.bf16.gmra.mxu0 %v2694
      %v2763 = vpop.f32.mrf.mxu0
      %v2764 = vadd.f32 0.0, %v2763
      %v2765 = vpop.f32.mrf.mxu0
      %v2766 = vadd.f32 0.0, %v2765
      %2767 = vmatmul.bf16.gmra.mxu0 %v2697
      %v2768 = vpop.f32.mrf.mxu0
      %v2769 = vadd.f32 0.0, %v2768
      %v2770 = vpop.f32.mrf.mxu0
      %v2771 = vadd.f32 0.0, %v2770
      %2772 = vmatmul.bf16.gmra.mxu0 %v2700
      %v2773 = vpop.f32.mrf.mxu0
      %v2774 = vadd.f32 0.0, %v2773
      %v2775 = vpop.f32.mrf.mxu0
      %v2776 = vadd.f32 0.0, %v2775
      %2777 = vmatmul.bf16.gmra.mxu0 %v2703
      %v2778 = vpop.f32.mrf.mxu0
      %v2779 = vadd.f32 0.0, %v2778
      %v2780 = vpop.f32.mrf.mxu0
      %v2781 = vadd.f32 0.0, %v2780
      %2782 = vmatmul.bf16.gmra.mxu0 %v2706
      %v2783 = vpop.f32.mrf.mxu0
      %v2784 = vadd.f32 0.0, %v2783
      %v2785 = vpop.f32.mrf.mxu0
      %v2786 = vadd.f32 0.0, %v2785
      %2787 = vmatmul.bf16.gmra.mxu0 %v2709
      %v2788 = vpop.f32.mrf.mxu0
      %v2789 = vadd.f32 0.0, %v2788
      %v2790 = vpop.f32.mrf.mxu0
      %v2791 = vadd.f32 0.0, %v2790
      %2792 = vmatmul.bf16.gmra.mxu0 %v2712
      %v2793 = vpop.f32.mrf.mxu0
      %v2794 = vadd.f32 0.0, %v2793
      %v2795 = vpop.f32.mrf.mxu0
      %v2796 = vadd.f32 0.0, %v2795
      %2797 = vmatmul.bf16.gmra.mxu0 %v2715
      %v2798 = vpop.f32.mrf.mxu0
      %v2799 = vadd.f32 0.0, %v2798
      %v2800 = vpop.f32.mrf.mxu0
      %v2801 = vadd.f32 0.0, %v2800
      %2802 = vmatmul.bf16.gmra.mxu0 %v2718
      %v2803 = vpop.f32.mrf.mxu0
      %v2804 = vadd.f32 0.0, %v2803
      %v2805 = vpop.f32.mrf.mxu0
      %v2806 = vadd.f32 0.0, %v2805
      %2807 = vmatmul.bf16.gmra.mxu0 %v2721
      %v2808 = vpop.f32.mrf.mxu0
      %v2809 = vadd.f32 0.0, %v2808
      %v2810 = vpop.f32.mrf.mxu0
      %v2811 = vadd.f32 0.0, %v2810
      %2812 = vmatmul.bf16.gmra.mxu0 %v2724
      %v2813 = vpop.f32.mrf.mxu0
      %v2814 = vadd.f32 0.0, %v2813
      %v2815 = vpop.f32.mrf.mxu0
      %v2816 = vadd.f32 0.0, %v2815
      %2817 = vdwg.mxu0
      %v2818 = vadd.f32 %v2372, %v2739
      %v2819 = vadd.f32 %v2373, %v2741
      %v2820 = vadd.f32 %v2374, %v2744
      %v2821 = vadd.f32 %v2375, %v2746
      %v2822 = vadd.f32 %v2376, %v2749
      %v2823 = vadd.f32 %v2377, %v2751
      %v2824 = vadd.f32 %v2378, %v2754
      %v2825 = vadd.f32 %v2379, %v2756
      %v2826 = vadd.f32 %v2380, %v2759
      %v2827 = vadd.f32 %v2381, %v2761
      %v2828 = vadd.f32 %v2382, %v2764
      %v2829 = vadd.f32 %v2383, %v2766
      %v2830 = vadd.f32 %v2384, %v2769
      %v2831 = vadd.f32 %v2385, %v2771
      %v2832 = vadd.f32 %v2386, %v2774
      %v2833 = vadd.f32 %v2387, %v2776
      %v2834 = vadd.f32 %v2388, %v2779
      %v2835 = vadd.f32 %v2389, %v2781
      %v2836 = vadd.f32 %v2390, %v2784
      %v2837 = vadd.f32 %v2391, %v2786
      %v2838 = vadd.f32 %v2392, %v2789
      %v2839 = vadd.f32 %v2393, %v2791
      %v2840 = vadd.f32 %v2394, %v2794
      %v2841 = vadd.f32 %v2395, %v2796
      %v2842 = vadd.f32 %v2396, %v2799
      %v2843 = vadd.f32 %v2397, %v2801
      %v2844 = vadd.f32 %v2398, %v2804
      %v2845 = vadd.f32 %v2399, %v2806
      %v2846 = vadd.f32 %v2400, %v2809
      %v2847 = vadd.f32 %v2401, %v2811
      %v2848 = vadd.f32 %v2402, %v2814
      %v2849 = vadd.f32 %v2403, %v2816
      %v2850 = vld [vmem:[%s2149] sm:$0xe]
      %v2851 = vld [vmem:[%s2149 + $0xc] sm:$0xe]
      %v2852 = vld [vmem:[%s2149 + $0x18] sm:$0xe]
      %v2853 = vld [vmem:[%s2149 + $0x24] sm:$0xe]
      %v2854 = vld [vmem:[%s2149 + $0x30] sm:$0xe]
      %v2855 = vld [vmem:[%s2149 + $0x3c] sm:$0xe]
      %v2856 = vld [vmem:[%s2149 + $0x48] sm:$0xe]
      %v2857 = vld [vmem:[%s2149 + $0x54] sm:$0xe]
      %v2858 = vld [vmem:[%s2149 + $0x60] sm:$0xe]
      %v2859 = vld [vmem:[%s2149 + $0x6c] sm:$0xe]
      %v2860 = vld [vmem:[%s2149 + $0x78] sm:$0xe]
      %v2861 = vld [vmem:[%s2149 + $0x84] sm:$0xe]
      %v2862 = vld [vmem:[%s2149 + $0x90] sm:$0xe]
      %v2863 = vld [vmem:[%s2149 + $0x9c] sm:$0xe]
      %v2864 = vld [vmem:[%s2149 + $0xa8] sm:$0xe]
      %v2865 = vld [vmem:[%s2149 + $0xb4] sm:$0xe]
      %v2866 = vunpack.c.l.bf16 %v2850
      %v2867 = vunpack.c.l.bf16 %v2851
      %v2868 = vunpack.c.l.bf16 %v2852
      %v2869 = vunpack.c.l.bf16 %v2853
      %v2870 = vunpack.c.l.bf16 %v2854
      %v2871 = vunpack.c.l.bf16 %v2855
      %v2872 = vunpack.c.l.bf16 %v2856
      %v2873 = vunpack.c.l.bf16 %v2857
      %v2874 = vunpack.c.l.bf16 %v2858
      %v2875 = vunpack.c.l.bf16 %v2859
      %v2876 = vunpack.c.l.bf16 %v2860
      %v2877 = vunpack.c.l.bf16 %v2861
      %v2878 = vunpack.c.l.bf16 %v2862
      %v2879 = vunpack.c.l.bf16 %v2863
      %v2880 = vunpack.c.l.bf16 %v2864
      %v2881 = vunpack.c.l.bf16 %v2865
      %v2898 = vrot.slane %v2866, 2
      %v2899 = vrot.slane %v2453, 2
      %v2900 = vsel %vm795, %v2898, %v2899
      %v2901 = vrot.slane %v2454, 2
      %v2902 = vsel %vm795, %v2899, %v2901
      %v2903 = vrot.slane %v2867, 2
      %v2904 = vrot.slane %v2456, 2
      %v2905 = vsel %vm795, %v2903, %v2904
      %v2906 = vrot.slane %v2457, 2
      %v2907 = vsel %vm795, %v2904, %v2906
      %v2908 = vrot.slane %v2868, 2
      %v2909 = vrot.slane %v2459, 2
      %v2910 = vsel %vm795, %v2908, %v2909
      %v2911 = vrot.slane %v2460, 2
      %v2912 = vsel %vm795, %v2909, %v2911
      %v2913 = vrot.slane %v2869, 2
      %v2914 = vrot.slane %v2462, 2
      %v2915 = vsel %vm795, %v2913, %v2914
      %v2916 = vrot.slane %v2463, 2
      %v2917 = vsel %vm795, %v2914, %v2916
      %v2918 = vrot.slane %v2870, 2
      %v2919 = vrot.slane %v2465, 2
      %v2920 = vsel %vm795, %v2918, %v2919
      %v2921 = vrot.slane %v2466, 2
      %v2922 = vsel %vm795, %v2919, %v2921
      %v2923 = vrot.slane %v2871, 2
      %v2924 = vrot.slane %v2468, 2
      %v2925 = vsel %vm795, %v2923, %v2924
      %v2926 = vrot.slane %v2469, 2
      %v2927 = vsel %vm795, %v2924, %v2926
      %v2928 = vrot.slane %v2872, 2
      %v2929 = vrot.slane %v2471, 2
      %v2930 = vsel %vm795, %v2928, %v2929
      %v2931 = vrot.slane %v2472, 2
      %v2932 = vsel %vm795, %v2929, %v2931
      %v2933 = vrot.slane %v2873, 2
      %v2934 = vrot.slane %v2474, 2
      %v2935 = vsel %vm795, %v2933, %v2934
      %v2936 = vrot.slane %v2475, 2
      %v2937 = vsel %vm795, %v2934, %v2936
      %v2938 = vrot.slane %v2874, 2
      %v2939 = vrot.slane %v2477, 2
      %v2940 = vsel %vm795, %v2938, %v2939
      %v2941 = vrot.slane %v2478, 2
      %v2942 = vsel %vm795, %v2939, %v2941
      %v2943 = vrot.slane %v2875, 2
      %v2944 = vrot.slane %v2480, 2
      %v2945 = vsel %vm795, %v2943, %v2944
      %v2946 = vrot.slane %v2481, 2
      %v2947 = vsel %vm795, %v2944, %v2946
      %v2948 = vrot.slane %v2876, 2
      %v2949 = vrot.slane %v2483, 2
      %v2950 = vsel %vm795, %v2948, %v2949
      %v2951 = vrot.slane %v2484, 2
      %v2952 = vsel %vm795, %v2949, %v2951
      %v2953 = vrot.slane %v2877, 2
      %v2954 = vrot.slane %v2486, 2
      %v2955 = vsel %vm795, %v2953, %v2954
      %v2956 = vrot.slane %v2487, 2
      %v2957 = vsel %vm795, %v2954, %v2956
      %v2958 = vrot.slane %v2878, 2
      %v2959 = vrot.slane %v2489, 2
      %v2960 = vsel %vm795, %v2958, %v2959
      %v2961 = vrot.slane %v2490, 2
      %v2962 = vsel %vm795, %v2959, %v2961
      %v2963 = vrot.slane %v2879, 2
      %v2964 = vrot.slane %v2492, 2
      %v2965 = vsel %vm795, %v2963, %v2964
      %v2966 = vrot.slane %v2493, 2
      %v2967 = vsel %vm795, %v2964, %v2966
      %v2968 = vrot.slane %v2880, 2
      %v2969 = vrot.slane %v2495, 2
      %v2970 = vsel %vm795, %v2968, %v2969
      %v2971 = vrot.slane %v2496, 2
      %v2972 = vsel %vm795, %v2969, %v2971
      %v2973 = vrot.slane %v2881, 2
      %v2974 = vrot.slane %v2498, 2
      %v2975 = vsel %vm795, %v2973, %v2974
      %v2976 = vrot.slane %v2499, 2
      %v2977 = vsel %vm795, %v2974, %v2976
      %v3010 = vpack.c.bf16 %v2902, %v2900
      %v3011 = vpack.c.bf16 %v2907, %v2905
      %v3012 = vpack.c.bf16 %v2912, %v2910
      %v3013 = vpack.c.bf16 %v2917, %v2915
      %v3014 = vpack.c.bf16 %v2922, %v2920
      %v3015 = vpack.c.bf16 %v2927, %v2925
      %v3016 = vpack.c.bf16 %v2932, %v2930
      %v3017 = vpack.c.bf16 %v2937, %v2935
      %v3018 = vpack.c.bf16 %v2942, %v2940
      %v3019 = vpack.c.bf16 %v2947, %v2945
      %v3020 = vpack.c.bf16 %v2952, %v2950
      %v3021 = vpack.c.bf16 %v2957, %v2955
      %v3022 = vpack.c.bf16 %v2962, %v2960
      %v3023 = vpack.c.bf16 %v2967, %v2965
      %v3024 = vpack.c.bf16 %v2972, %v2970
      %v3025 = vpack.c.bf16 %v2977, %v2975
      %s3026 = scalar_lea.vmem %s1, 16
      %v3027 = vld [vmem:[%s3026] sm:$0x3]
      %v3029 = vsel %vm465, %v3010, 0
      %v3032 = vsel %vm465, %v3011, 0
      %v3035 = vsel %vm465, %v3012, 0
      %v3038 = vsel %vm465, %v3013, 0
      %v3041 = vsel %vm465, %v3014, 0
      %v3044 = vsel %vm465, %v3015, 0
      %v3047 = vsel %vm465, %v3016, 0
      %v3050 = vsel %vm465, %v3017, 0
      %v3053 = vsel %vm465, %v3018, 0
      %v3056 = vsel %vm465, %v3019, 0
      %v3059 = vsel %vm465, %v3020, 0
      %v3062 = vsel %vm465, %v3021, 0
      %v3065 = vsel %vm465, %v3022, 0
      %v3068 = vsel %vm465, %v3023, 0
      %v3071 = vsel %vm465, %v3024, 0
      %v3074 = vsel %vm465, %v3025, 0
      %v3077 = vsel %vm514, %v3027, 0
      %3079 = vmatpush.bf16.msra.mxu0 0
      %3080 = vmatpush.bf16.msra.mxu0 0
      %3081 = vmatpush.bf16.msra.mxu0 0
      %3082 = vmatpush.bf16.msra.mxu0 0
      %3083 = vmatpush.bf16.msra.mxu0 0
      %3084 = vmatpush.bf16.msra.mxu0 0
      %3085 = vmatpush.bf16.msra.mxu0 0
      %3086 = vmatpush.bf16.msra.mxu0 %v3077
      %3087 = vmatmul.bf16.gmra.mxu0 %v3029
      %v3088 = vpop.f32.mrf.mxu0
      %v3089 = vadd.f32 0.0, %v3088
      %v3090 = vpop.f32.mrf.mxu0
      %v3091 = vadd.f32 0.0, %v3090
      %3092 = vmatmul.bf16.gmra.mxu0 %v3032
      %v3093 = vpop.f32.mrf.mxu0
      %v3094 = vadd.f32 0.0, %v3093
      %v3095 = vpop.f32.mrf.mxu0
      %v3096 = vadd.f32 0.0, %v3095
      %3097 = vmatmul.bf16.gmra.mxu0 %v3035
      %v3098 = vpop.f32.mrf.mxu0
      %v3099 = vadd.f32 0.0, %v3098
      %v3100 = vpop.f32.mrf.mxu0
      %v3101 = vadd.f32 0.0, %v3100
      %3102 = vmatmul.bf16.gmra.mxu0 %v3038
      %v3103 = vpop.f32.mrf.mxu0
      %v3104 = vadd.f32 0.0, %v3103
      %v3105 = vpop.f32.mrf.mxu0
      %v3106 = vadd.f32 0.0, %v3105
      %3107 = vmatmul.bf16.gmra.mxu0 %v3041
      %v3108 = vpop.f32.mrf.mxu0
      %v3109 = vadd.f32 0.0, %v3108
      %v3110 = vpop.f32.mrf.mxu0
      %v3111 = vadd.f32 0.0, %v3110
      %3112 = vmatmul.bf16.gmra.mxu0 %v3044
      %v3113 = vpop.f32.mrf.mxu0
      %v3114 = vadd.f32 0.0, %v3113
      %v3115 = vpop.f32.mrf.mxu0
      %v3116 = vadd.f32 0.0, %v3115
      %3117 = vmatmul.bf16.gmra.mxu0 %v3047
      %v3118 = vpop.f32.mrf.mxu0
      %v3119 = vadd.f32 0.0, %v3118
      %v3120 = vpop.f32.mrf.mxu0
      %v3121 = vadd.f32 0.0, %v3120
      %3122 = vmatmul.bf16.gmra.mxu0 %v3050
      %v3123 = vpop.f32.mrf.mxu0
      %v3124 = vadd.f32 0.0, %v3123
      %v3125 = vpop.f32.mrf.mxu0
      %v3126 = vadd.f32 0.0, %v3125
      %3127 = vmatmul.bf16.gmra.mxu0 %v3053
      %v3128 = vpop.f32.mrf.mxu0
      %v3129 = vadd.f32 0.0, %v3128
      %v3130 = vpop.f32.mrf.mxu0
      %v3131 = vadd.f32 0.0, %v3130
      %3132 = vmatmul.bf16.gmra.mxu0 %v3056
      %v3133 = vpop.f32.mrf.mxu0
      %v3134 = vadd.f32 0.0, %v3133
      %v3135 = vpop.f32.mrf.mxu0
      %v3136 = vadd.f32 0.0, %v3135
      %3137 = vmatmul.bf16.gmra.mxu0 %v3059
      %v3138 = vpop.f32.mrf.mxu0
      %v3139 = vadd.f32 0.0, %v3138
      %v3140 = vpop.f32.mrf.mxu0
      %v3141 = vadd.f32 0.0, %v3140
      %3142 = vmatmul.bf16.gmra.mxu0 %v3062
      %v3143 = vpop.f32.mrf.mxu0
      %v3144 = vadd.f32 0.0, %v3143
      %v3145 = vpop.f32.mrf.mxu0
      %v3146 = vadd.f32 0.0, %v3145
      %3147 = vmatmul.bf16.gmra.mxu0 %v3065
      %v3148 = vpop.f32.mrf.mxu0
      %v3149 = vadd.f32 0.0, %v3148
      %v3150 = vpop.f32.mrf.mxu0
      %v3151 = vadd.f32 0.0, %v3150
      %3152 = vmatmul.bf16.gmra.mxu0 %v3068
      %v3153 = vpop.f32.mrf.mxu0
      %v3154 = vadd.f32 0.0, %v3153
      %v3155 = vpop.f32.mrf.mxu0
      %v3156 = vadd.f32 0.0, %v3155
      %3157 = vmatmul.bf16.gmra.mxu0 %v3071
      %v3158 = vpop.f32.mrf.mxu0
      %v3159 = vadd.f32 0.0, %v3158
      %v3160 = vpop.f32.mrf.mxu0
      %v3161 = vadd.f32 0.0, %v3160
      %3162 = vmatmul.bf16.gmra.mxu0 %v3074
      %v3163 = vpop.f32.mrf.mxu0
      %v3164 = vadd.f32 0.0, %v3163
      %v3165 = vpop.f32.mrf.mxu0
      %v3166 = vadd.f32 0.0, %v3165
      %3167 = vdwg.mxu0
      %v3168 = vadd.f32 %v2818, %v3089
      %v3169 = vadd.f32 %v2819, %v3091
      %v3170 = vadd.f32 %v2820, %v3094
      %v3171 = vadd.f32 %v2821, %v3096
      %v3172 = vadd.f32 %v2822, %v3099
      %v3173 = vadd.f32 %v2823, %v3101
      %v3174 = vadd.f32 %v2824, %v3104
      %v3175 = vadd.f32 %v2825, %v3106
      %v3176 = vadd.f32 %v2826, %v3109
      %v3177 = vadd.f32 %v2827, %v3111
      %v3178 = vadd.f32 %v2828, %v3114
      %v3179 = vadd.f32 %v2829, %v3116
      %v3180 = vadd.f32 %v2830, %v3119
      %v3181 = vadd.f32 %v2831, %v3121
      %v3182 = vadd.f32 %v2832, %v3124
      %v3183 = vadd.f32 %v2833, %v3126
      %v3184 = vadd.f32 %v2834, %v3129
      %v3185 = vadd.f32 %v2835, %v3131
      %v3186 = vadd.f32 %v2836, %v3134
      %v3187 = vadd.f32 %v2837, %v3136
      %v3188 = vadd.f32 %v2838, %v3139
      %v3189 = vadd.f32 %v2839, %v3141
      %v3190 = vadd.f32 %v2840, %v3144
      %v3191 = vadd.f32 %v2841, %v3146
      %v3192 = vadd.f32 %v2842, %v3149
      %v3193 = vadd.f32 %v2843, %v3151
      %v3194 = vadd.f32 %v2844, %v3154
      %v3195 = vadd.f32 %v2845, %v3156
      %v3196 = vadd.f32 %v2846, %v3159
      %v3197 = vadd.f32 %v2847, %v3161
      %v3198 = vadd.f32 %v2848, %v3164
      %v3199 = vadd.f32 %v2849, %v3166
      %v3200 = vld [vmem:[%s2] sm:$0x1]
      %v3202 = vperm.slane %v3200, 0
      %v3204 = vadd.f32 %v3168, %v3202
      %v3205 = vadd.f32 %v3169, %v3202
      %v3206 = vadd.f32 %v3170, %v3202
      %v3207 = vadd.f32 %v3171, %v3202
      %v3208 = vadd.f32 %v3172, %v3202
      %v3209 = vadd.f32 %v3173, %v3202
      %v3210 = vadd.f32 %v3174, %v3202
      %v3211 = vadd.f32 %v3175, %v3202
      %v3212 = vadd.f32 %v3176, %v3202
      %v3213 = vadd.f32 %v3177, %v3202
      %v3214 = vadd.f32 %v3178, %v3202
      %v3215 = vadd.f32 %v3179, %v3202
      %v3216 = vadd.f32 %v3180, %v3202
      %v3217 = vadd.f32 %v3181, %v3202
      %v3218 = vadd.f32 %v3182, %v3202
      %v3219 = vadd.f32 %v3183, %v3202
      %v3220 = vadd.f32 %v3184, %v3202
      %v3221 = vadd.f32 %v3185, %v3202
      %v3222 = vadd.f32 %v3186, %v3202
      %v3223 = vadd.f32 %v3187, %v3202
      %v3224 = vadd.f32 %v3188, %v3202
      %v3225 = vadd.f32 %v3189, %v3202
      %v3226 = vadd.f32 %v3190, %v3202
      %v3227 = vadd.f32 %v3191, %v3202
      %v3228 = vadd.f32 %v3192, %v3202
      %v3229 = vadd.f32 %v3193, %v3202
      %v3230 = vadd.f32 %v3194, %v3202
      %v3231 = vadd.f32 %v3195, %v3202
      %v3232 = vadd.f32 %v3196, %v3202
      %v3233 = vadd.f32 %v3197, %v3202
      %v3234 = vadd.f32 %v3198, %v3202
      %v3235 = vadd.f32 %v3199, %v3202
      %v3236 = vmax.f32 %v3204, 0.0
      %v3237 = vmax.f32 %v3205, 0.0
      %v3238 = vmax.f32 %v3206, 0.0
      %v3239 = vmax.f32 %v3207, 0.0
      %v3240 = vmax.f32 %v3208, 0.0
      %v3241 = vmax.f32 %v3209, 0.0
      %v3242 = vmax.f32 %v3210, 0.0
      %v3243 = vmax.f32 %v3211, 0.0
      %v3244 = vmax.f32 %v3212, 0.0
      %v3245 = vmax.f32 %v3213, 0.0
      %v3246 = vmax.f32 %v3214, 0.0
      %v3247 = vmax.f32 %v3215, 0.0
      %v3248 = vmax.f32 %v3216, 0.0
      %v3249 = vmax.f32 %v3217, 0.0
      %v3250 = vmax.f32 %v3218, 0.0
      %v3251 = vmax.f32 %v3219, 0.0
      %v3252 = vmax.f32 %v3220, 0.0
      %v3253 = vmax.f32 %v3221, 0.0
      %v3254 = vmax.f32 %v3222, 0.0
      %v3255 = vmax.f32 %v3223, 0.0
      %v3256 = vmax.f32 %v3224, 0.0
      %v3257 = vmax.f32 %v3225, 0.0
      %v3258 = vmax.f32 %v3226, 0.0
      %v3259 = vmax.f32 %v3227, 0.0
      %v3260 = vmax.f32 %v3228, 0.0
      %v3261 = vmax.f32 %v3229, 0.0
      %v3262 = vmax.f32 %v3230, 0.0
      %v3263 = vmax.f32 %v3231, 0.0
      %v3264 = vmax.f32 %v3232, 0.0
      %v3265 = vmax.f32 %v3233, 0.0
      %v3266 = vmax.f32 %v3234, 0.0
      %v3267 = vmax.f32 %v3235, 0.0
      %v3268 = vpack.c.bf16 %v3236, %v3236
      %v3269 = vpack.c.bf16 %v3237, %v3237
      %v3270 = vpack.c.bf16 %v3238, %v3238
      %v3271 = vpack.c.bf16 %v3239, %v3239
      %v3272 = vpack.c.bf16 %v3240, %v3240
      %v3273 = vpack.c.bf16 %v3241, %v3241
      %v3274 = vpack.c.bf16 %v3242, %v3242
      %v3275 = vpack.c.bf16 %v3243, %v3243
      %v3276 = vpack.c.bf16 %v3244, %v3244
      %v3277 = vpack.c.bf16 %v3245, %v3245
      %v3278 = vpack.c.bf16 %v3246, %v3246
      %v3279 = vpack.c.bf16 %v3247, %v3247
      %v3280 = vpack.c.bf16 %v3248, %v3248
      %v3281 = vpack.c.bf16 %v3249, %v3249
      %v3282 = vpack.c.bf16 %v3250, %v3250
      %v3283 = vpack.c.bf16 %v3251, %v3251
      %v3284 = vpack.c.bf16 %v3252, %v3252
      %v3285 = vpack.c.bf16 %v3253, %v3253
      %v3286 = vpack.c.bf16 %v3254, %v3254
      %v3287 = vpack.c.bf16 %v3255, %v3255
      %v3288 = vpack.c.bf16 %v3256, %v3256
      %v3289 = vpack.c.bf16 %v3257, %v3257
      %v3290 = vpack.c.bf16 %v3258, %v3258
      %v3291 = vpack.c.bf16 %v3259, %v3259
      %v3292 = vpack.c.bf16 %v3260, %v3260
      %v3293 = vpack.c.bf16 %v3261, %v3261
      %v3294 = vpack.c.bf16 %v3262, %v3262
      %v3295 = vpack.c.bf16 %v3263, %v3263
      %v3296 = vpack.c.bf16 %v3264, %v3264
      %v3297 = vpack.c.bf16 %v3265, %v3265
      %v3298 = vpack.c.bf16 %v3266, %v3266
      %v3299 = vpack.c.bf16 %v3267, %v3267
      %vm3300 = vcmask 519168
      %3301 = vst.msk [vmem:[%s170] sm:$0xf] %vm3300, %v3268
      %3302 = vst.msk [vmem:[%s170 + $0x4] sm:$0xf] %vm3300, %v3269
      %3303 = vst.msk [vmem:[%s170 + $0x8] sm:$0xf] %vm3300, %v3270
      %3304 = vst.msk [vmem:[%s170 + $0xc] sm:$0xf] %vm3300, %v3271
      %3305 = vst.msk [vmem:[%s170 + $0x10] sm:$0xf] %vm3300, %v3272
      %3306 = vst.msk [vmem:[%s170 + $0x14] sm:$0xf] %vm3300, %v3273
      %3307 = vst.msk [vmem:[%s170 + $0x18] sm:$0xf] %vm3300, %v3274
      %3308 = vst.msk [vmem:[%s170 + $0x1c] sm:$0xf] %vm3300, %v3275
      %3309 = vst.msk [vmem:[%s170 + $0x20] sm:$0xf] %vm3300, %v3276
      %3310 = vst.msk [vmem:[%s170 + $0x24] sm:$0xf] %vm3300, %v3277
      %3311 = vst.msk [vmem:[%s170 + $0x28] sm:$0xf] %vm3300, %v3278
      %3312 = vst.msk [vmem:[%s170 + $0x2c] sm:$0xf] %vm3300, %v3279
      %3313 = vst.msk [vmem:[%s170 + $0x30] sm:$0xf] %vm3300, %v3280
      %3314 = vst.msk [vmem:[%s170 + $0x34] sm:$0xf] %vm3300, %v3281
      %3315 = vst.msk [vmem:[%s170 + $0x38] sm:$0xf] %vm3300, %v3282
      %3316 = vst.msk [vmem:[%s170 + $0x3c] sm:$0xf] %vm3300, %v3283
      %3317 = vst.msk [vmem:[%s170 + $0x40] sm:$0xf] %vm3300, %v3284
      %3318 = vst.msk [vmem:[%s170 + $0x44] sm:$0xf] %vm3300, %v3285
      %3319 = vst.msk [vmem:[%s170 + $0x48] sm:$0xf] %vm3300, %v3286
      %3320 = vst.msk [vmem:[%s170 + $0x4c] sm:$0xf] %vm3300, %v3287
      %3321 = vst.msk [vmem:[%s170 + $0x50] sm:$0xf] %vm3300, %v3288
      %3322 = vst.msk [vmem:[%s170 + $0x54] sm:$0xf] %vm3300, %v3289
      %3323 = vst.msk [vmem:[%s170 + $0x58] sm:$0xf] %vm3300, %v3290
      %3324 = vst.msk [vmem:[%s170 + $0x5c] sm:$0xf] %vm3300, %v3291
      %3325 = vst.msk [vmem:[%s170 + $0x60] sm:$0xf] %vm3300, %v3292
      %3326 = vst.msk [vmem:[%s170 + $0x64] sm:$0xf] %vm3300, %v3293
      %3327 = vst.msk [vmem:[%s170 + $0x68] sm:$0xf] %vm3300, %v3294
      %3328 = vst.msk [vmem:[%s170 + $0x6c] sm:$0xf] %vm3300, %v3295
      %3329 = vst.msk [vmem:[%s170 + $0x70] sm:$0xf] %vm3300, %v3296
      %3330 = vst.msk [vmem:[%s170 + $0x74] sm:$0xf] %vm3300, %v3297
      %3331 = vst.msk [vmem:[%s170 + $0x78] sm:$0xf] %vm3300, %v3298
      %3332 = vst.msk [vmem:[%s170 + $0x7c] sm:$0xf] %vm3300, %v3299
      %s3333 = smul.u32 32, %s14
      %p3334 = scmp.lt.s32.totalorder %s3333, 63
      %s3335 = scalar_select %p3334, %s3333, 63
      %s3336 = smul.addr %s3335, 4
      %s3337 = scalar_lea.vmem %s3, %s3336
      // Predicated region
      $region33: #{tpu_custom_call.1} parent=31 // pred_check
        %p3338 = pneg %p100
      $region34: #{tpu_custom_call.1} parent=31 // pred_check_branch
        %3340 = sbr.rel (%p3338) target = $region36
      $region35: #{tpu_custom_call.1} parent=31 // pred_region
        %s3341 = smul.u32 32, %s14
      $region36: #{tpu_custom_call.1} parent=31 // pred_fallthru
        _
    $region32: #{tpu_custom_call.1} parent=5 // pred_fallthru
      _
    %p3342 = scmp.le.s32.totalorder 2, %s9
    // Predicated region
    $region37: #{tpu_custom_call.1} parent=5 // pred_check
      %p3343 = pneg %p3342
    $region38: #{tpu_custom_call.1} parent=5 // pred_check_branch
      %3345 = sbr.rel (%p3343) target = $region40
    $region39: #{tpu_custom_call.1} parent=5 // pred_region
      %s3346 = ssub.s32 %s9, 2
      // Predicated region
      $region41: #{tpu_custom_call.1} parent=39 // pred_check
        %p3347 = pneg %p106
      $region42: #{tpu_custom_call.1} parent=39 // pred_check_branch
        %3349 = sbr.rel (%p3347) target = $region44
      $region43: #{tpu_custom_call.1} parent=39 // pred_region
        %s3350 = smul.u32 32, %s15
        %p3351 = scmp.lt.s32.totalorder %s3350, 63
        %s3352 = scalar_select %p3351, %s3350, 63
        %s3353 = smul.addr %s3352, 4
        %s3354 = scalar_lea.vmem %s3, %s3353
      $region44: #{tpu_custom_call.1} parent=39 // pred_fallthru
        _
    $region40: #{tpu_custom_call.1} parent=5 // pred_fallthru
      _
  $region6: #{tpu_custom_call.1} parent=0 // loop_footer
    %s13 = sadd.s32 1, %s9
  $region7: #{tpu_custom_call.1} parent=0 // loop_footer_branch
    %8 = sbr.rel target = $region3
  $region8: #{tpu_custom_call.1} parent=0 // loop_exit
    _

</llo_original>
